<compile_context>
chip_gen: v7x
topology: tpu7x:2x2x1
jax: 0.10.0
libtpu: 0.0.40
codegen_flags: <defaults>
</compile_context>

<pallas_src>
import functools

import jax
import jax.numpy as jnp
from jax.experimental import pallas as pl
from jax.experimental.pallas import tpu as pltpu


# ----------------------------------------------------------------------------
# Fused kernel
# ----------------------------------------------------------------------------
def fused_kernel(xcat_ref, mean_ref, var_ref, w1_ref, b1_ref, w2_ref, b2_ref,
                 avg_ref, wc_ref, bc_ref, pos_ref, wh_ref, bh_ref, wp_ref,
                 wm_ref, bm_ref, logits_ref, mix_ref,
                 *, emb, nodes_per_graph, num_ce, dp):
    f32 = jnp.float32
    bf16 = jnp.bfloat16
    eps = 1e-5

    n = nodes_per_graph
    g_blk = logits_ref.shape[0]

    # ---- FeatureTransform ---------------------------------------------------
    # DataNormalization (inference path: running stats), f32 on a full,
    # zero-padded 128-lane slab (pad columns: mean=0, var=1 -> normalized 0).
    x = xcat_ref[...]                                              # (n_blk, dcat_p)
    xn = (x - mean_ref[...]) * jax.lax.rsqrt(var_ref[...] + eps)

    # Block-diagonal Linear -> ReLU -> block-diagonal Linear (bf16 MXU, f32 acc).
    h = jnp.dot(xn.astype(bf16), w1_ref[...], preferred_element_type=f32)
    h = jnp.maximum(h + b1_ref[...], 0.0)                          # (n_blk, F*E)
    h = jnp.dot(h.astype(bf16), w2_ref[...], preferred_element_type=f32) + b2_ref[...]

    # Per-feature LayerNorm statistics via ONE block-averaging matmul per stat
    # (avg = blockdiag(ones(E,E)/E), entries exact in f32).
    mu = jnp.dot(h, avg_ref[...], preferred_element_type=f32)      # (n_blk, F*E)
    hc = h - mu
    var = jnp.dot(hc * hc, avg_ref[...], preferred_element_type=f32)
    hnorm = hc * jax.lax.rsqrt(var + eps)

    # LN gamma/beta + feature-mean + shared Linear are pre-folded into (Wc, bc);
    # ReLU; NodeIndividualizer positional-embedding add.
    xe = jnp.dot(hnorm.astype(bf16), wc_ref[...], preferred_element_type=f32)
    xe = jnp.maximum(xe + bc_ref[...], 0.0) + pos_ref[...]         # (n_blk, E)

    # ---- EdgePredictor ------------------------------------------------------
    he = jnp.dot(xe.astype(bf16), wh_ref[...], preferred_element_type=f32)
    he = jnp.maximum(he + bh_ref[...], 0.0)                        # (n_blk, E)

    # All (component, edge-type) projections in ONE lane-dense matmul.
    p = jnp.dot(he.astype(bf16), wp_ref[...], preferred_element_type=f32)  # (n_blk, CE*Dp)

    scale = 1.0 / (float(dp) ** 0.5)

    # Pairwise scores per (c,e): batched dot_general over graphs.
    scores = []
    for ce in range(num_ce):                                       # static, small unroll
        p_ce = p[:, ce * dp:(ce + 1) * dp].reshape(g_blk, n, dp).astype(bf16)
        s = jnp.einsum('gid,gjd->gij', p_ce, p_ce, preferred_element_type=f32)
        scores.append(s)
    s_all = jnp.concatenate(scores, axis=-1) * scale               # (g_blk, n, CE*n)

    # Lane-dense epilogue: flatten node-i into the lane dim with static slices
    # + one concatenate, then a SINGLE full-width (n*CE*n = 256 lane) store.
    logits_ref[...] = jnp.concatenate([s_all[:, i, :] for i in range(n)], axis=-1)

    # Mean-pool over nodes (graphs statically full -> constant 1/n) -> mixture.
    pooled = jnp.mean(he.reshape(g_blk, n, emb), axis=1)           # (g_blk, E)
    mix_ref[...] = jnp.dot(pooled.astype(bf16), wm_ref[...],
                           preferred_element_type=f32) + bm_ref[...]


def _pick_num_blocks(tb):
    """Grid steps: 1 on single-TC chips (v5e/v6e); 2 on v7x when blocks stay
    (8,128)-aligned.  At tiny batch sizes this resolves to 1 everywhere, which
    is also what the per-step fixed overhead (~0.35us) favors."""
    try:
        kind = jax.devices()[0].device_kind.lower()
    except Exception:
        kind = ""
    if "v7" in kind and tb % 2 == 0 and (tb // 2) % 8 == 0:
        return 2
    return 1


def fused_forward(xcat, pos, ft, ep, *, nodes_per_graph, emb_dim,
                  num_components, num_edge_types, dot_product_dim):
    n_total, dcat_p = xcat.shape
    n = nodes_per_graph
    tb = n_total // n
    fe = ft["w2"].shape[0]
    num_ce = num_components * num_edge_types
    cedp = num_ce * dot_product_dim
    out_lanes = n * num_ce * n                 # lane-dense flattened logits width

    nb = _pick_num_blocks(tb)
    g_blk = tb // nb
    n_blk = g_blk * n

    kernel = functools.partial(
        fused_kernel, emb=emb_dim, nodes_per_graph=n, num_ce=num_ce,
        dp=dot_product_dim)

    full = lambda i: (0, 0)
    logits, mix = pl.pallas_call(
        kernel,
        out_shape=(
            jax.ShapeDtypeStruct((tb, out_lanes), jnp.float32),
            jax.ShapeDtypeStruct((tb, num_components), jnp.float32),
        ),
        grid=(nb,),
        in_specs=[
            pl.BlockSpec((n_blk, dcat_p), lambda i: (i, 0)),           # xcat (padded)
            pl.BlockSpec((1, dcat_p), full),                           # running_mean
            pl.BlockSpec((1, dcat_p), full),                           # running_var
            pl.BlockSpec((dcat_p, fe), full),                          # W1 block-diag (bf16)
            pl.BlockSpec((1, fe), full),                               # b1
            pl.BlockSpec((fe, fe), full),                              # W2 block-diag (bf16)
            pl.BlockSpec((1, fe), full),                               # b2
            pl.BlockSpec((fe, fe), full),                              # block-avg matrix (f32)
            pl.BlockSpec((fe, emb_dim), full),                         # Wc combined (bf16)
            pl.BlockSpec((1, emb_dim), full),                          # bc combined
            pl.BlockSpec((n_blk, emb_dim), lambda i: (i, 0)),          # pos_embed[ordering]
            pl.BlockSpec((emb_dim, emb_dim), full),                    # Wh (bf16)
            pl.BlockSpec((1, emb_dim), full),                          # bh
            pl.BlockSpec((emb_dim, cedp), full),                       # Wp packed (bf16)
            pl.BlockSpec((emb_dim, num_components), full),             # Wm (bf16)
            pl.BlockSpec((1, num_components), full),                   # bm
        ],
        out_specs=(
            pl.BlockSpec((g_blk, out_lanes), lambda i: (i, 0)),
            pl.BlockSpec((g_blk, num_components), lambda i: (i, 0)),
        ),
        compiler_params=pltpu.CompilerParams(
            dimension_semantics=("parallel",) * 1),
    )(xcat, ft["mean"], ft["var"], ft["w1"], ft["b1"], ft["w2"], ft["b2"],
      ft["avg"], ft["wc"], ft["bc"], pos, ep["wh"], ep["bh"], ep["wp"],
      ep["wm"], ep["bm"])
    return logits, mix


# ----------------------------------------------------------------------------
# Parameter construction (deterministic, synthetic) — pre-packed layouts
# ----------------------------------------------------------------------------
def make_feature_transform_params(key, feature_dims, emb_dim, in_dim_padded):
    """Block-diagonal packed params for the node FeatureTransform."""
    num_feats = len(feature_dims)
    dcat = sum(feature_dims)
    assert in_dim_padded >= dcat
    fe = num_feats * emb_dim
    keys = jax.random.split(key, 4 * num_feats + 1)

    # DataNormalization buffers (zero-padded columns are numerically inert:
    # (0 - 0) * rsqrt(1 + eps) == 0 and they hit zero rows of W1).
    mean = jnp.zeros((1, in_dim_padded), jnp.float32)
    var = jnp.ones((1, in_dim_padded), jnp.float32)

    w1 = jnp.zeros((in_dim_padded, fe), jnp.float32)  # off-diag blocks EXACT zeros
    b1 = jnp.zeros((1, fe), jnp.float32)
    w2 = jnp.zeros((fe, fe), jnp.float32)
    b2 = jnp.zeros((1, fe), jnp.float32)
    gamma = jnp.ones((fe,), jnp.float32)              # LN gamma
    beta = jnp.zeros((fe,), jnp.float32)              # LN beta

    off = 0
    for f, dim in enumerate(feature_dims):
        w1f = 0.05 * jax.random.normal(keys[4 * f + 0], (dim, emb_dim), jnp.float32)
        w2f = 0.05 * jax.random.normal(keys[4 * f + 1], (emb_dim, emb_dim), jnp.float32)
        b1f = 0.01 * jax.random.normal(keys[4 * f + 2], (emb_dim,), jnp.float32)
        b2f = 0.01 * jax.random.normal(keys[4 * f + 3], (emb_dim,), jnp.float32)
        lo, hi = f * emb_dim, (f + 1) * emb_dim
        w1 = w1.at[off:off + dim, lo:hi].set(w1f)
        w2 = w2.at[lo:hi, lo:hi].set(w2f)
        b1 = b1.at[0, lo:hi].set(b1f)
        b2 = b2.at[0, lo:hi].set(b2f)
        off += dim

    ws = 0.05 * jax.random.normal(keys[-1], (emb_dim, emb_dim), jnp.float32)
    bs = jnp.zeros((1, emb_dim), jnp.float32)

    # One block-averaging matrix for per-feature LayerNorm stats: mu = h @ avg.
    avg = jnp.kron(jnp.eye(num_feats, dtype=jnp.float32),
                   jnp.full((emb_dim, emb_dim), 1.0 / emb_dim, jnp.float32))

    # Fold LN gamma/beta + feature-mean (1/F * tiled eye) + shared Linear into
    # one (fe, emb) matrix / (1, emb) bias: xe = relu(hnorm @ Wc + bc) + pos.
    sagg = jnp.tile(jnp.eye(emb_dim, dtype=jnp.float32), (num_feats, 1))  # (fe, E)
    sw = jnp.dot(sagg, ws) / float(num_feats)                             # (fe, E)
    wc = gamma[:, None] * sw
    bc = bs + jnp.dot(beta[None, :], sw)

    return dict(
        mean=mean, var=var,
        w1=w1.astype(jnp.bfloat16), b1=b1,
        w2=w2.astype(jnp.bfloat16), b2=b2,
        avg=avg, wc=wc.astype(jnp.bfloat16), bc=bc)


def make_edge_predictor_params(key, emb_dim, num_components, num_edge_types, dp):
    ke = jax.random.split(key, 3)
    wh = 0.05 * jax.random.normal(ke[0], (emb_dim, emb_dim), jnp.float32)
    wp = 0.05 * jax.random.normal(
        ke[1], (num_components, num_edge_types, emb_dim, dp), jnp.float32)
    # Pack all (c, e) projections lane-dense: (E, C*ET*Dp); column block (c*ET+e).
    wp_packed = jnp.transpose(wp, (2, 0, 1, 3)).reshape(
        emb_dim, num_components * num_edge_types * dp)
    wm = 0.05 * jax.random.normal(ke[2], (emb_dim, num_components), jnp.float32)
    return dict(
        wh=wh.astype(jnp.bfloat16), bh=jnp.zeros((1, emb_dim), jnp.float32),
        wp=wp_packed.astype(jnp.bfloat16),
        wm=wm.astype(jnp.bfloat16), bm=jnp.zeros((1, num_components), jnp.float32))


# ----------------------------------------------------------------------------
# MMLinkPredictor forward (thin XLA glue + one fused Pallas kernel)
# ----------------------------------------------------------------------------
def mm_link_predictor_forward(params, node_extra_features, ordering, *,
                              filtration_size, batch_per_step, nodes_per_graph,
                              emb_dim, num_components, num_edge_types,
                              dot_product_dim):
    t, b, n = filtration_size, batch_per_step, nodes_per_graph
    tb = t * b

    # Concatenate node extra features along channels and zero-pad to the
    # lane-aligned width the (padded) DataNormalization buffers expect.
    xcat = jnp.concatenate(node_extra_features, axis=-1)                 # (N_total, sum d_f)
    dcat_pad = params["ft"]["mean"].shape[1]
    pad = dcat_pad - xcat.shape[1]
    if pad > 0:
        xcat = jnp.pad(xcat, ((0, 0), (0, pad)))

    # NodeIndividualizer('ordering'): positional-embedding gather in glue,
    # added inside the fused kernel.
    pos = jnp.take(params["pos_embed"], ordering, axis=0)                # (N_total, E)

    # to_dense_batch mask (all graphs full -> all True).
    mask = jnp.ones((t, b, n), dtype=jnp.bool_)

    logits_k, mix_k = fused_forward(
        xcat, pos, params["ft"], params["edge_pred"],
        nodes_per_graph=n, emb_dim=emb_dim, num_components=num_components,
        num_edge_types=num_edge_types, dot_product_dim=dot_product_dim)

    # Kernel layout (TB, (N_i, c, e, N_j)) -> PyTorch convention (T,B,C,N,N,ET).
    logits = logits_k.reshape(t, b, n, num_components, num_edge_types, n)
    logits = jnp.transpose(logits, (0, 1, 3, 2, 5, 4))
    mixture_logits = mix_k.reshape(t, b, num_components)

    return mixture_logits, logits, mask


# ----------------------------------------------------------------------------
# main
# ----------------------------------------------------------------------------
if __name__ == "__main__":
    FILTRATION_SIZE = 3          # t
    BATCH_PER_STEP = 2           # b  -> TB = t*b dense graphs
    NODES_PER_GRAPH = 8          # n
    EMBED_DIM = 32
    NUM_EDGE_TYPES = 2
    NUM_COMPONENTS = 2
    DOT_PRODUCT_DIM = 32         # defaults to embed_dim
    MAX_NODES = 16
    NODE_FEAT_DIMS = (4, 4, 2, 20)   # eigenvectors, eigenvalues, cycle_features, rwpe

    TB = FILTRATION_SIZE * BATCH_PER_STEP
    N_TOTAL = TB * NODES_PER_GRAPH
    DCAT = sum(NODE_FEAT_DIMS)
    DCAT_PAD = ((DCAT + 127) // 128) * 128        # 30 -> 128, lane-aligned input

    root = jax.random.PRNGKey(0)
    k_nft, k_pos, k_ep, k_in = jax.random.split(root, 4)

    params = {
        "ft": make_feature_transform_params(k_nft, NODE_FEAT_DIMS, EMBED_DIM, DCAT_PAD),
        "pos_embed": 0.05 * jax.random.normal(k_pos, (MAX_NODES, EMBED_DIM), jnp.float32),
        "edge_pred": make_edge_predictor_params(
            k_ep, EMBED_DIM, NUM_COMPONENTS, NUM_EDGE_TYPES, DOT_PRODUCT_DIM),
    }

    # Synthetic inputs (stand-ins for the torch_geometric Batch attributes).
    ki = jax.random.split(k_in, len(NODE_FEAT_DIMS))
    node_extra_features = [
        jax.random.normal(ki[i], (N_TOTAL, d), jnp.float32)
        for i, d in enumerate(NODE_FEAT_DIMS)
    ]
    ordering = jnp.tile(jnp.arange(NODES_PER_GRAPH, dtype=jnp.int32), TB)

    fwd = jax.jit(functools.partial(
        mm_link_predictor_forward,
        filtration_size=FILTRATION_SIZE,
        batch_per_step=BATCH_PER_STEP,
        nodes_per_graph=NODES_PER_GRAPH,
        emb_dim=EMBED_DIM,
        num_components=NUM_COMPONENTS,
        num_edge_types=NUM_EDGE_TYPES,
        dot_product_dim=DOT_PRODUCT_DIM,
    ))
    mixture_logits, logits, mask = fwd(params, node_extra_features, ordering)
    jax.block_until_ready((mixture_logits, logits, mask))

    assert mixture_logits.shape == (FILTRATION_SIZE, BATCH_PER_STEP, NUM_COMPONENTS)
    assert logits.shape == (FILTRATION_SIZE, BATCH_PER_STEP, NUM_COMPONENTS,
                            NODES_PER_GRAPH, NODES_PER_GRAPH, NUM_EDGE_TYPES)
    assert mask.shape == (FILTRATION_SIZE, BATCH_PER_STEP, NODES_PER_GRAPH)
    assert bool(jnp.all(jnp.isfinite(mixture_logits))) and bool(jnp.all(jnp.isfinite(logits)))
    print("KERNEL_OK")
</pallas_src>

<mosaic_0001>
module attributes {stable_mosaic.version = 11 : i64} {
  func.func @fused_kernel(%arg0: i32, %arg1: memref<48x128xf32, #tpu.memory_space<vmem>>, %arg2: memref<1x128xf32, #tpu.memory_space<vmem>>, %arg3: memref<1x128xf32, #tpu.memory_space<vmem>>, %arg4: memref<128x128xbf16, #tpu.memory_space<vmem>>, %arg5: memref<1x128xf32, #tpu.memory_space<vmem>>, %arg6: memref<128x128xbf16, #tpu.memory_space<vmem>>, %arg7: memref<1x128xf32, #tpu.memory_space<vmem>>, %arg8: memref<128x128xf32, #tpu.memory_space<vmem>>, %arg9: memref<128x32xbf16, #tpu.memory_space<vmem>>, %arg10: memref<1x32xf32, #tpu.memory_space<vmem>>, %arg11: memref<48x32xf32, #tpu.memory_space<vmem>>, %arg12: memref<32x32xbf16, #tpu.memory_space<vmem>>, %arg13: memref<1x32xf32, #tpu.memory_space<vmem>>, %arg14: memref<32x128xbf16, #tpu.memory_space<vmem>>, %arg15: memref<32x2xbf16, #tpu.memory_space<vmem>>, %arg16: memref<1x2xf32, #tpu.memory_space<vmem>>, %arg17: memref<6x256xf32, #tpu.memory_space<vmem>>, %arg18: memref<6x2xf32, #tpu.memory_space<vmem>>) attributes {dimension_semantics = [#tpu.dimension_semantics<parallel>], iteration_bounds = array<i64: 1>, scalar_prefetch = 0 : i64, scratch_operands = 0 : i64, tpu.core_type = #tpu.core_type<tc>, window_params = [{transform_indices = @transform_0, window_bounds = array<i64: 48, 128>}, {pipeline_mode = #tpu.pipeline_mode<synchronous>, transform_indices = @transform_1, window_bounds = array<i64: 1, 128>}, {pipeline_mode = #tpu.pipeline_mode<synchronous>, transform_indices = @transform_2, window_bounds = array<i64: 1, 128>}, {pipeline_mode = #tpu.pipeline_mode<synchronous>, transform_indices = @transform_3, window_bounds = array<i64: 128, 128>}, {pipeline_mode = #tpu.pipeline_mode<synchronous>, transform_indices = @transform_4, window_bounds = array<i64: 1, 128>}, {pipeline_mode = #tpu.pipeline_mode<synchronous>, transform_indices = @transform_5, window_bounds = array<i64: 128, 128>}, {pipeline_mode = #tpu.pipeline_mode<synchronous>, transform_indices = @transform_6, window_bounds = array<i64: 1, 128>}, {pipeline_mode = #tpu.pipeline_mode<synchronous>, transform_indices = @transform_7, window_bounds = array<i64: 128, 128>}, {pipeline_mode = #tpu.pipeline_mode<synchronous>, transform_indices = @transform_8, window_bounds = array<i64: 128, 32>}, {pipeline_mode = #tpu.pipeline_mode<synchronous>, transform_indices = @transform_9, window_bounds = array<i64: 1, 32>}, {transform_indices = @transform_10, window_bounds = array<i64: 48, 32>}, {pipeline_mode = #tpu.pipeline_mode<synchronous>, transform_indices = @transform_11, window_bounds = array<i64: 32, 32>}, {pipeline_mode = #tpu.pipeline_mode<synchronous>, transform_indices = @transform_12, window_bounds = array<i64: 1, 32>}, {pipeline_mode = #tpu.pipeline_mode<synchronous>, transform_indices = @transform_13, window_bounds = array<i64: 32, 128>}, {pipeline_mode = #tpu.pipeline_mode<synchronous>, transform_indices = @transform_14, window_bounds = array<i64: 32, 2>}, {pipeline_mode = #tpu.pipeline_mode<synchronous>, transform_indices = @transform_15, window_bounds = array<i64: 1, 2>}, {transform_indices = @transform_16, window_bounds = array<i64: 6, 256>}, {transform_indices = @transform_17, window_bounds = array<i64: 6, 2>}]} {
    %c0 = arith.constant 0 : index
    %c0_0 = arith.constant 0 : index
    %0 = vector.load %arg1[%c0, %c0_0] : memref<48x128xf32, #tpu.memory_space<vmem>>, vector<48x128xf32>
    %c0_1 = arith.constant 0 : index
    %c0_2 = arith.constant 0 : index
    %1 = vector.load %arg2[%c0_1, %c0_2] : memref<1x128xf32, #tpu.memory_space<vmem>>, vector<1x128xf32>
    %2 = vector.broadcast %1 : vector<1x128xf32> to vector<48x128xf32>
    %3 = arith.subf %0, %2 : vector<48x128xf32>
    %c0_3 = arith.constant 0 : index
    %c0_4 = arith.constant 0 : index
    %4 = vector.load %arg3[%c0_3, %c0_4] : memref<1x128xf32, #tpu.memory_space<vmem>>, vector<1x128xf32>
    %cst = arith.constant 9.99999974E-6 : f32
    %5 = vector.broadcast %cst : f32 to vector<1x128xf32>
    %6 = arith.addf %4, %5 : vector<1x128xf32>
    %7 = math.rsqrt %6 : vector<1x128xf32>
    %8 = vector.broadcast %7 : vector<1x128xf32> to vector<48x128xf32>
    %9 = arith.mulf %3, %8 : vector<48x128xf32>
    %10 = arith.truncf %9 : vector<48x128xf32> to vector<48x128xbf16>
    %c0_5 = arith.constant 0 : index
    %c0_6 = arith.constant 0 : index
    %11 = vector.load %arg4[%c0_5, %c0_6] : memref<128x128xbf16, #tpu.memory_space<vmem>>, vector<128x128xbf16>
    %cst_7 = arith.constant dense<0.000000e+00> : vector<48x128xf32>
    %12 = tpu.matmul %10, %11, %cst_7 {dimension_numbers = #tpu.dot_dimension_numbers<[1], [0], [0], [1], [0, 0, 1, 1], [], []>} : vector<48x128xbf16>, vector<128x128xbf16>, vector<48x128xf32> -> vector<48x128xf32>
    %c0_8 = arith.constant 0 : index
    %c0_9 = arith.constant 0 : index
    %13 = vector.load %arg5[%c0_8, %c0_9] : memref<1x128xf32, #tpu.memory_space<vmem>>, vector<1x128xf32>
    %14 = vector.broadcast %13 : vector<1x128xf32> to vector<48x128xf32>
    %15 = arith.addf %12, %14 : vector<48x128xf32>
    %cst_10 = arith.constant 0.000000e+00 : f32
    %16 = vector.broadcast %cst_10 : f32 to vector<48x128xf32>
    %17 = arith.maximumf %15, %16 : vector<48x128xf32>
    %18 = arith.truncf %17 : vector<48x128xf32> to vector<48x128xbf16>
    %c0_11 = arith.constant 0 : index
    %c0_12 = arith.constant 0 : index
    %19 = vector.load %arg6[%c0_11, %c0_12] : memref<128x128xbf16, #tpu.memory_space<vmem>>, vector<128x128xbf16>
    %cst_13 = arith.constant dense<0.000000e+00> : vector<48x128xf32>
    %20 = tpu.matmul %18, %19, %cst_13 {dimension_numbers = #tpu.dot_dimension_numbers<[1], [0], [0], [1], [0, 0, 1, 1], [], []>} : vector<48x128xbf16>, vector<128x128xbf16>, vector<48x128xf32> -> vector<48x128xf32>
    %c0_14 = arith.constant 0 : index
    %c0_15 = arith.constant 0 : index
    %21 = vector.load %arg7[%c0_14, %c0_15] : memref<1x128xf32, #tpu.memory_space<vmem>>, vector<1x128xf32>
    %22 = vector.broadcast %21 : vector<1x128xf32> to vector<48x128xf32>
    %23 = arith.addf %20, %22 : vector<48x128xf32>
    %c0_16 = arith.constant 0 : index
    %c0_17 = arith.constant 0 : index
    %24 = vector.load %arg8[%c0_16, %c0_17] : memref<128x128xf32, #tpu.memory_space<vmem>>, vector<128x128xf32>
    %cst_18 = arith.constant dense<0.000000e+00> : vector<48x128xf32>
    %25 = tpu.matmul %23, %24, %cst_18 {dimension_numbers = #tpu.dot_dimension_numbers<[1], [0], [0], [1], [0, 0, 1, 1], [], []>} : vector<48x128xf32>, vector<128x128xf32>, vector<48x128xf32> -> vector<48x128xf32>
    %26 = arith.subf %23, %25 : vector<48x128xf32>
    %27 = arith.mulf %26, %26 : vector<48x128xf32>
    %c0_19 = arith.constant 0 : index
    %c0_20 = arith.constant 0 : index
    %28 = vector.load %arg8[%c0_19, %c0_20] : memref<128x128xf32, #tpu.memory_space<vmem>>, vector<128x128xf32>
    %cst_21 = arith.constant dense<0.000000e+00> : vector<48x128xf32>
    %29 = tpu.matmul %27, %28, %cst_21 {dimension_numbers = #tpu.dot_dimension_numbers<[1], [0], [0], [1], [0, 0, 1, 1], [], []>} : vector<48x128xf32>, vector<128x128xf32>, vector<48x128xf32> -> vector<48x128xf32>
    %cst_22 = arith.constant 9.99999974E-6 : f32
    %30 = vector.broadcast %cst_22 : f32 to vector<48x128xf32>
    %31 = arith.addf %29, %30 : vector<48x128xf32>
    %32 = math.rsqrt %31 : vector<48x128xf32>
    %33 = arith.mulf %26, %32 : vector<48x128xf32>
    %34 = arith.truncf %33 : vector<48x128xf32> to vector<48x128xbf16>
    %c0_23 = arith.constant 0 : index
    %c0_24 = arith.constant 0 : index
    %35 = vector.load %arg9[%c0_23, %c0_24] : memref<128x32xbf16, #tpu.memory_space<vmem>>, vector<128x32xbf16>
    %cst_25 = arith.constant dense<0.000000e+00> : vector<48x32xf32>
    %36 = tpu.matmul %34, %35, %cst_25 {dimension_numbers = #tpu.dot_dimension_numbers<[1], [0], [0], [1], [0, 0, 1, 1], [], []>} : vector<48x128xbf16>, vector<128x32xbf16>, vector<48x32xf32> -> vector<48x32xf32>
    %c0_26 = arith.constant 0 : index
    %c0_27 = arith.constant 0 : index
    %37 = vector.load %arg10[%c0_26, %c0_27] : memref<1x32xf32, #tpu.memory_space<vmem>>, vector<1x32xf32>
    %38 = vector.broadcast %37 : vector<1x32xf32> to vector<48x32xf32>
    %39 = arith.addf %36, %38 : vector<48x32xf32>
    %cst_28 = arith.constant 0.000000e+00 : f32
    %40 = vector.broadcast %cst_28 : f32 to vector<48x32xf32>
    %41 = arith.maximumf %39, %40 : vector<48x32xf32>
    %c0_29 = arith.constant 0 : index
    %c0_30 = arith.constant 0 : index
    %42 = vector.load %arg11[%c0_29, %c0_30] : memref<48x32xf32, #tpu.memory_space<vmem>>, vector<48x32xf32>
    %43 = arith.addf %41, %42 : vector<48x32xf32>
    %44 = arith.truncf %43 : vector<48x32xf32> to vector<48x32xbf16>
    %c0_31 = arith.constant 0 : index
    %c0_32 = arith.constant 0 : index
    %45 = vector.load %arg12[%c0_31, %c0_32] : memref<32x32xbf16, #tpu.memory_space<vmem>>, vector<32x32xbf16>
    %cst_33 = arith.constant dense<0.000000e+00> : vector<48x32xf32>
    %46 = tpu.matmul %44, %45, %cst_33 {dimension_numbers = #tpu.dot_dimension_numbers<[1], [0], [0], [1], [0, 0, 1, 1], [], []>} : vector<48x32xbf16>, vector<32x32xbf16>, vector<48x32xf32> -> vector<48x32xf32>
    %c0_34 = arith.constant 0 : index
    %c0_35 = arith.constant 0 : index
    %47 = vector.load %arg13[%c0_34, %c0_35] : memref<1x32xf32, #tpu.memory_space<vmem>>, vector<1x32xf32>
    %48 = vector.broadcast %47 : vector<1x32xf32> to vector<48x32xf32>
    %49 = arith.addf %46, %48 : vector<48x32xf32>
    %cst_36 = arith.constant 0.000000e+00 : f32
    %50 = vector.broadcast %cst_36 : f32 to vector<48x32xf32>
    %51 = arith.maximumf %49, %50 : vector<48x32xf32>
    %52 = arith.truncf %51 : vector<48x32xf32> to vector<48x32xbf16>
    %c0_37 = arith.constant 0 : index
    %c0_38 = arith.constant 0 : index
    %53 = vector.load %arg14[%c0_37, %c0_38] : memref<32x128xbf16, #tpu.memory_space<vmem>>, vector<32x128xbf16>
    %cst_39 = arith.constant dense<0.000000e+00> : vector<48x128xf32>
    %54 = tpu.matmul %52, %53, %cst_39 {dimension_numbers = #tpu.dot_dimension_numbers<[1], [0], [0], [1], [0, 0, 1, 1], [], []>} : vector<48x32xbf16>, vector<32x128xbf16>, vector<48x128xf32> -> vector<48x128xf32>
    %55 = vector.extract_strided_slice %54 {offsets = [0, 0], sizes = [48, 32], strides = [1, 1]} : vector<48x128xf32> to vector<48x32xf32>
    %56 = vector.shape_cast %55 : vector<48x32xf32> to vector<6x8x32xf32>
    %57 = arith.truncf %56 : vector<6x8x32xf32> to vector<6x8x32xbf16>
    "tpu.trace_start"() <{level = 10 : i32, message = "gid,gjd->gij"}> : () -> ()
    %cst_40 = arith.constant dense<0.000000e+00> : vector<6x8x8xf32>
    %58 = tpu.matmul %57, %57, %cst_40 {dimension_numbers = #tpu.dot_dimension_numbers<[2], [2], [1], [1], [0, 0, 0, 1, 1, 1], [0], [0]>} : vector<6x8x32xbf16>, vector<6x8x32xbf16>, vector<6x8x8xf32> -> vector<6x8x8xf32>
    "tpu.trace_stop"() : () -> ()
    %59 = vector.extract_strided_slice %54 {offsets = [0, 32], sizes = [48, 32], strides = [1, 1]} : vector<48x128xf32> to vector<48x32xf32>
    %60 = vector.shape_cast %59 : vector<48x32xf32> to vector<6x8x32xf32>
    %61 = arith.truncf %60 : vector<6x8x32xf32> to vector<6x8x32xbf16>
    "tpu.trace_start"() <{level = 10 : i32, message = "gid,gjd->gij"}> : () -> ()
    %cst_41 = arith.constant dense<0.000000e+00> : vector<6x8x8xf32>
    %62 = tpu.matmul %61, %61, %cst_41 {dimension_numbers = #tpu.dot_dimension_numbers<[2], [2], [1], [1], [0, 0, 0, 1, 1, 1], [0], [0]>} : vector<6x8x32xbf16>, vector<6x8x32xbf16>, vector<6x8x8xf32> -> vector<6x8x8xf32>
    "tpu.trace_stop"() : () -> ()
    %63 = vector.extract_strided_slice %54 {offsets = [0, 64], sizes = [48, 32], strides = [1, 1]} : vector<48x128xf32> to vector<48x32xf32>
    %64 = vector.shape_cast %63 : vector<48x32xf32> to vector<6x8x32xf32>
    %65 = arith.truncf %64 : vector<6x8x32xf32> to vector<6x8x32xbf16>
    "tpu.trace_start"() <{level = 10 : i32, message = "gid,gjd->gij"}> : () -> ()
    %cst_42 = arith.constant dense<0.000000e+00> : vector<6x8x8xf32>
    %66 = tpu.matmul %65, %65, %cst_42 {dimension_numbers = #tpu.dot_dimension_numbers<[2], [2], [1], [1], [0, 0, 0, 1, 1, 1], [0], [0]>} : vector<6x8x32xbf16>, vector<6x8x32xbf16>, vector<6x8x8xf32> -> vector<6x8x8xf32>
    "tpu.trace_stop"() : () -> ()
    %67 = vector.extract_strided_slice %54 {offsets = [0, 96], sizes = [48, 32], strides = [1, 1]} : vector<48x128xf32> to vector<48x32xf32>
    %68 = vector.shape_cast %67 : vector<48x32xf32> to vector<6x8x32xf32>
    %69 = arith.truncf %68 : vector<6x8x32xf32> to vector<6x8x32xbf16>
    "tpu.trace_start"() <{level = 10 : i32, message = "gid,gjd->gij"}> : () -> ()
    %cst_43 = arith.constant dense<0.000000e+00> : vector<6x8x8xf32>
    %70 = tpu.matmul %69, %69, %cst_43 {dimension_numbers = #tpu.dot_dimension_numbers<[2], [2], [1], [1], [0, 0, 0, 1, 1, 1], [0], [0]>} : vector<6x8x32xbf16>, vector<6x8x32xbf16>, vector<6x8x8xf32> -> vector<6x8x8xf32>
    "tpu.trace_stop"() : () -> ()
    %71 = tpu.concatenate %58, %62, %66, %70 in 2 : vector<6x8x8xf32>, vector<6x8x8xf32>, vector<6x8x8xf32>, vector<6x8x8xf32> -> vector<6x8x32xf32>
    %cst_44 = arith.constant 0.176776692 : f32
    %72 = vector.broadcast %cst_44 : f32 to vector<6x8x32xf32>
    %73 = arith.mulf %71, %72 : vector<6x8x32xf32>
    %74 = vector.extract_strided_slice %73 {offsets = [0, 0, 0], sizes = [6, 1, 32], strides = [1, 1, 1]} : vector<6x8x32xf32> to vector<6x1x32xf32>
    %75 = vector.shape_cast %74 : vector<6x1x32xf32> to vector<6x32xf32>
    %76 = vector.extract_strided_slice %73 {offsets = [0, 1, 0], sizes = [6, 1, 32], strides = [1, 1, 1]} : vector<6x8x32xf32> to vector<6x1x32xf32>
    %77 = vector.shape_cast %76 : vector<6x1x32xf32> to vector<6x32xf32>
    %78 = vector.extract_strided_slice %73 {offsets = [0, 2, 0], sizes = [6, 1, 32], strides = [1, 1, 1]} : vector<6x8x32xf32> to vector<6x1x32xf32>
    %79 = vector.shape_cast %78 : vector<6x1x32xf32> to vector<6x32xf32>
    %80 = vector.extract_strided_slice %73 {offsets = [0, 3, 0], sizes = [6, 1, 32], strides = [1, 1, 1]} : vector<6x8x32xf32> to vector<6x1x32xf32>
    %81 = vector.shape_cast %80 : vector<6x1x32xf32> to vector<6x32xf32>
    %82 = vector.extract_strided_slice %73 {offsets = [0, 4, 0], sizes = [6, 1, 32], strides = [1, 1, 1]} : vector<6x8x32xf32> to vector<6x1x32xf32>
    %83 = vector.shape_cast %82 : vector<6x1x32xf32> to vector<6x32xf32>
    %84 = vector.extract_strided_slice %73 {offsets = [0, 5, 0], sizes = [6, 1, 32], strides = [1, 1, 1]} : vector<6x8x32xf32> to vector<6x1x32xf32>
    %85 = vector.shape_cast %84 : vector<6x1x32xf32> to vector<6x32xf32>
    %86 = vector.extract_strided_slice %73 {offsets = [0, 6, 0], sizes = [6, 1, 32], strides = [1, 1, 1]} : vector<6x8x32xf32> to vector<6x1x32xf32>
    %87 = vector.shape_cast %86 : vector<6x1x32xf32> to vector<6x32xf32>
    %88 = vector.extract_strided_slice %73 {offsets = [0, 7, 0], sizes = [6, 1, 32], strides = [1, 1, 1]} : vector<6x8x32xf32> to vector<6x1x32xf32>
    %89 = vector.shape_cast %88 : vector<6x1x32xf32> to vector<6x32xf32>
    %90 = tpu.concatenate %75, %77, %79, %81, %83, %85, %87, %89 in 1 : vector<6x32xf32>, vector<6x32xf32>, vector<6x32xf32>, vector<6x32xf32>, vector<6x32xf32>, vector<6x32xf32>, vector<6x32xf32>, vector<6x32xf32> -> vector<6x256xf32>
    %c0_45 = arith.constant 0 : index
    %c0_46 = arith.constant 0 : index
    %91 = vector.load %arg17[%c0_45, %c0_46] : memref<6x256xf32, #tpu.memory_space<vmem>>, vector<6x256xf32>
    tpu.vector_store %arg17[%c0_45, %c0_46], %90 {strides = array<i32>} : memref<6x256xf32, #tpu.memory_space<vmem>>, vector<6x256xf32>,
    %92 = vector.shape_cast %51 : vector<48x32xf32> to vector<6x8x32xf32>
    %cst_47 = arith.constant dense<0.000000e+00> : vector<6x32xf32>
    %93 = vector.multi_reduction <add>, %92, %cst_47 [1] : vector<6x8x32xf32> to vector<6x32xf32>
    %cst_48 = arith.constant 8.000000e+00 : f32
    %94 = vector.broadcast %cst_48 : f32 to vector<6x32xf32>
    %95 = arith.divf %93, %94 : vector<6x32xf32>
    %96 = arith.truncf %95 : vector<6x32xf32> to vector<6x32xbf16>
    %c0_49 = arith.constant 0 : index
    %c0_50 = arith.constant 0 : index
    %97 = vector.load %arg15[%c0_49, %c0_50] : memref<32x2xbf16, #tpu.memory_space<vmem>>, vector<32x2xbf16>
    %cst_51 = arith.constant dense<0.000000e+00> : vector<6x2xf32>
    %98 = tpu.matmul %96, %97, %cst_51 {dimension_numbers = #tpu.dot_dimension_numbers<[1], [0], [0], [1], [0, 0, 1, 1], [], []>} : vector<6x32xbf16>, vector<32x2xbf16>, vector<6x2xf32> -> vector<6x2xf32>
    %c0_52 = arith.constant 0 : index
    %c0_53 = arith.constant 0 : index
    %99 = vector.load %arg16[%c0_52, %c0_53] : memref<1x2xf32, #tpu.memory_space<vmem>>, vector<1x2xf32>
    %100 = vector.broadcast %99 : vector<1x2xf32> to vector<6x2xf32>
    %101 = arith.addf %98, %100 : vector<6x2xf32>
    %c0_54 = arith.constant 0 : index
    %c0_55 = arith.constant 0 : index
    %102 = vector.load %arg18[%c0_54, %c0_55] : memref<6x2xf32, #tpu.memory_space<vmem>>, vector<6x2xf32>
    tpu.vector_store %arg18[%c0_54, %c0_55], %101 {strides = array<i32>} : memref<6x2xf32, #tpu.memory_space<vmem>>, vector<6x2xf32>,
    return
  }
  func.func @transform_0(%arg0: i32) -> (i32, i32) {
    %c0_i32 = arith.constant 0 : i32
    %c0_i32_0 = arith.constant 0 : i32
    return %arg0, %c0_i32 : i32, i32
  }
  func.func @transform_1(%arg0: i32) -> (i32, i32) {
    %c0_i32 = arith.constant 0 : i32
    %c0_i32_0 = arith.constant 0 : i32
    %c0_i32_1 = arith.constant 0 : i32
    return %c0_i32, %c0_i32_0 : i32, i32
  }
  func.func @transform_2(%arg0: i32) -> (i32, i32) {
    %c0_i32 = arith.constant 0 : i32
    %c0_i32_0 = arith.constant 0 : i32
    %c0_i32_1 = arith.constant 0 : i32
    return %c0_i32, %c0_i32_0 : i32, i32
  }
  func.func @transform_3(%arg0: i32) -> (i32, i32) {
    %c0_i32 = arith.constant 0 : i32
    %c0_i32_0 = arith.constant 0 : i32
    %c0_i32_1 = arith.constant 0 : i32
    return %c0_i32, %c0_i32_0 : i32, i32
  }
  func.func @transform_4(%arg0: i32) -> (i32, i32) {
    %c0_i32 = arith.constant 0 : i32
    %c0_i32_0 = arith.constant 0 : i32
    %c0_i32_1 = arith.constant 0 : i32
    return %c0_i32, %c0_i32_0 : i32, i32
  }
  func.func @transform_5(%arg0: i32) -> (i32, i32) {
    %c0_i32 = arith.constant 0 : i32
    %c0_i32_0 = arith.constant 0 : i32
    %c0_i32_1 = arith.constant 0 : i32
    return %c0_i32, %c0_i32_0 : i32, i32
  }
  func.func @transform_6(%arg0: i32) -> (i32, i32) {
    %c0_i32 = arith.constant 0 : i32
    %c0_i32_0 = arith.constant 0 : i32
    %c0_i32_1 = arith.constant 0 : i32
    return %c0_i32, %c0_i32_0 : i32, i32
  }
  func.func @transform_7(%arg0: i32) -> (i32, i32) {
    %c0_i32 = arith.constant 0 : i32
    %c0_i32_0 = arith.constant 0 : i32
    %c0_i32_1 = arith.constant 0 : i32
    return %c0_i32, %c0_i32_0 : i32, i32
  }
  func.func @transform_8(%arg0: i32) -> (i32, i32) {
    %c0_i32 = arith.constant 0 : i32
    %c0_i32_0 = arith.constant 0 : i32
    %c0_i32_1 = arith.constant 0 : i32
    return %c0_i32, %c0_i32_0 : i32, i32
  }
  func.func @transform_9(%arg0: i32) -> (i32, i32) {
    %c0_i32 = arith.constant 0 : i32
    %c0_i32_0 = arith.constant 0 : i32
    %c0_i32_1 = arith.constant 0 : i32
    return %c0_i32, %c0_i32_0 : i32, i32
  }
  func.func @transform_10(%arg0: i32) -> (i32, i32) {
    %c0_i32 = arith.constant 0 : i32
    %c0_i32_0 = arith.constant 0 : i32
    return %arg0, %c0_i32 : i32, i32
  }
  func.func @transform_11(%arg0: i32) -> (i32, i32) {
    %c0_i32 = arith.constant 0 : i32
    %c0_i32_0 = arith.constant 0 : i32
    %c0_i32_1 = arith.constant 0 : i32
    return %c0_i32, %c0_i32_0 : i32, i32
  }
  func.func @transform_12(%arg0: i32) -> (i32, i32) {
    %c0_i32 = arith.constant 0 : i32
    %c0_i32_0 = arith.constant 0 : i32
    %c0_i32_1 = arith.constant 0 : i32
    return %c0_i32, %c0_i32_0 : i32, i32
  }
  func.func @transform_13(%arg0: i32) -> (i32, i32) {
    %c0_i32 = arith.constant 0 : i32
    %c0_i32_0 = arith.constant 0 : i32
    %c0_i32_1 = arith.constant 0 : i32
    return %c0_i32, %c0_i32_0 : i32, i32
  }
  func.func @transform_14(%arg0: i32) -> (i32, i32) {
    %c0_i32 = arith.constant 0 : i32
    %c0_i32_0 = arith.constant 0 : i32
    %c0_i32_1 = arith.constant 0 : i32
    return %c0_i32, %c0_i32_0 : i32, i32
  }
  func.func @transform_15(%arg0: i32) -> (i32, i32) {
    %c0_i32 = arith.constant 0 : i32
    %c0_i32_0 = arith.constant 0 : i32
    %c0_i32_1 = arith.constant 0 : i32
    return %c0_i32, %c0_i32_0 : i32, i32
  }
  func.func @transform_16(%arg0: i32) -> (i32, i32) {
    %c0_i32 = arith.constant 0 : i32
    %c0_i32_0 = arith.constant 0 : i32
    return %arg0, %c0_i32 : i32, i32
  }
  func.func @transform_17(%arg0: i32) -> (i32, i32) {
    %c0_i32 = arith.constant 0 : i32
    %c0_i32_0 = arith.constant 0 : i32
    return %arg0, %c0_i32 : i32, i32
  }
}

</mosaic_0001>

<llo_original>
// kernel: mm_link_predictor_forward.1
$region0: #{mm_link_predictor_forward.1}
  #allocation0 [shape = 'u32[]', space=smem, size = 0x4, offset = 0x4, fixed_abs, tag = 'smem constant byte address 0x4 - core index']
  #allocation1 [shape = 'u32[144,128]{1,0:T(1,128)}', space=vmem, size = 0x12000, scoped, tag = 'internal scratch']
  %s0 = inlined_call_operand.vmem [shape: f32[48,128], index: 0, kind: input, shape index: {}]
  %s1 = inlined_call_operand.vmem [shape: f32[1,128], index: 1, kind: input, shape index: {}]
  %s2 = inlined_call_operand.vmem [shape: f32[1,128], index: 2, kind: input, shape index: {}]
  %s3 = inlined_call_operand.vmem [shape: bf16[128,128], index: 3, kind: input, shape index: {}]
  %s4 = inlined_call_operand.vmem [shape: f32[1,128], index: 4, kind: input, shape index: {}]
  %s5 = inlined_call_operand.vmem [shape: bf16[128,128], index: 5, kind: input, shape index: {}]
  %s6 = inlined_call_operand.vmem [shape: f32[1,128], index: 6, kind: input, shape index: {}]
  %s7 = inlined_call_operand.vmem [shape: f32[128,128], index: 7, kind: input, shape index: {}]
  %s8 = inlined_call_operand.vmem [shape: bf16[128,32], index: 8, kind: input, shape index: {}]
  %s9 = inlined_call_operand.vmem [shape: f32[1,32], index: 9, kind: input, shape index: {}]
  %s10 = inlined_call_operand.vmem [shape: f32[48,32], index: 10, kind: input, shape index: {}]
  %s11 = inlined_call_operand.vmem [shape: bf16[32,32], index: 11, kind: input, shape index: {}]
  %s12 = inlined_call_operand.vmem [shape: f32[1,32], index: 12, kind: input, shape index: {}]
  %s13 = inlined_call_operand.vmem [shape: bf16[32,128], index: 13, kind: input, shape index: {}]
  %s14 = inlined_call_operand.vmem [shape: bf16[32,2], index: 14, kind: input, shape index: {}]
  %s15 = inlined_call_operand.vmem [shape: f32[1,2], index: 15, kind: input, shape index: {}]
  %s16 = inlined_call_operand.vmem [shape: f32[6,256], index: 16, kind: output, shape index: {0}]
  %s17 = inlined_call_operand.vmem [shape: f32[6,2], index: 17, kind: output, shape index: {1}]
  %18 = xla_tuple %s16, %s17
  %s19 = sld [smem:[#allocation0]]
  $region82: #{mm_link_predictor_forward.1} parent=0
    _
  %s21 = ssub.s32 1, %s19
  %s22 = scalar_select 0, %s21, %s19
  // Predicated region
  $region2: #{mm_link_predictor_forward.1} parent=0 // pred_check
    _
  $region3: #{mm_link_predictor_forward.1} parent=0 // pred_check_branch
    %24 = sbr.rel (0) target = $region5
  $region4: #{mm_link_predictor_forward.1} parent=0 // pred_region
    _
  $region5: #{mm_link_predictor_forward.1} parent=0 // pred_fallthru
    _
  // Predicated region
  $region6: #{mm_link_predictor_forward.1} parent=0 // pred_check
    _
  $region7: #{mm_link_predictor_forward.1} parent=0 // pred_check_branch
    %26 = sbr.rel (0) target = $region9
  $region8: #{mm_link_predictor_forward.1} parent=0 // pred_region
    _
  $region9: #{mm_link_predictor_forward.1} parent=0 // pred_fallthru
    _
  // Predicated region
  $region10: #{mm_link_predictor_forward.1} parent=0 // pred_check
    _
  $region11: #{mm_link_predictor_forward.1} parent=0 // pred_check_branch
    %28 = sbr.rel (0) target = $region13
  $region12: #{mm_link_predictor_forward.1} parent=0 // pred_region
    _
  $region13: #{mm_link_predictor_forward.1} parent=0 // pred_fallthru
    _
  // Predicated region
  $region14: #{mm_link_predictor_forward.1} parent=0 // pred_check
    _
  $region15: #{mm_link_predictor_forward.1} parent=0 // pred_check_branch
    %30 = sbr.rel (0) target = $region17
  $region16: #{mm_link_predictor_forward.1} parent=0 // pred_region
    _
  $region17: #{mm_link_predictor_forward.1} parent=0 // pred_fallthru
    _
  // Predicated region
  $region18: #{mm_link_predictor_forward.1} parent=0 // pred_check
    _
  $region19: #{mm_link_predictor_forward.1} parent=0 // pred_check_branch
    %32 = sbr.rel (0) target = $region21
  $region20: #{mm_link_predictor_forward.1} parent=0 // pred_region
    _
  $region21: #{mm_link_predictor_forward.1} parent=0 // pred_fallthru
    _
  // Predicated region
  $region22: #{mm_link_predictor_forward.1} parent=0 // pred_check
    _
  $region23: #{mm_link_predictor_forward.1} parent=0 // pred_check_branch
    %34 = sbr.rel (0) target = $region25
  $region24: #{mm_link_predictor_forward.1} parent=0 // pred_region
    _
  $region25: #{mm_link_predictor_forward.1} parent=0 // pred_fallthru
    _
  // Predicated region
  $region26: #{mm_link_predictor_forward.1} parent=0 // pred_check
    _
  $region27: #{mm_link_predictor_forward.1} parent=0 // pred_check_branch
    %36 = sbr.rel (0) target = $region29
  $region28: #{mm_link_predictor_forward.1} parent=0 // pred_region
    _
  $region29: #{mm_link_predictor_forward.1} parent=0 // pred_fallthru
    _
  // Predicated region
  $region30: #{mm_link_predictor_forward.1} parent=0 // pred_check
    _
  $region31: #{mm_link_predictor_forward.1} parent=0 // pred_check_branch
    %38 = sbr.rel (0) target = $region33
  $region32: #{mm_link_predictor_forward.1} parent=0 // pred_region
    _
  $region33: #{mm_link_predictor_forward.1} parent=0 // pred_fallthru
    _
  // Predicated region
  $region34: #{mm_link_predictor_forward.1} parent=0 // pred_check
    _
  $region35: #{mm_link_predictor_forward.1} parent=0 // pred_check_branch
    %40 = sbr.rel (0) target = $region37
  $region36: #{mm_link_predictor_forward.1} parent=0 // pred_region
    _
  $region37: #{mm_link_predictor_forward.1} parent=0 // pred_fallthru
    _
  // Predicated region
  $region38: #{mm_link_predictor_forward.1} parent=0 // pred_check
    _
  $region39: #{mm_link_predictor_forward.1} parent=0 // pred_check_branch
    %42 = sbr.rel (0) target = $region41
  $region40: #{mm_link_predictor_forward.1} parent=0 // pred_region
    _
  $region41: #{mm_link_predictor_forward.1} parent=0 // pred_fallthru
    _
  // Predicated region
  $region42: #{mm_link_predictor_forward.1} parent=0 // pred_check
    _
  $region43: #{mm_link_predictor_forward.1} parent=0 // pred_check_branch
    %44 = sbr.rel (0) target = $region45
  $region44: #{mm_link_predictor_forward.1} parent=0 // pred_region
    _
  $region45: #{mm_link_predictor_forward.1} parent=0 // pred_fallthru
    _
  // Predicated region
  $region46: #{mm_link_predictor_forward.1} parent=0 // pred_check
    _
  $region47: #{mm_link_predictor_forward.1} parent=0 // pred_check_branch
    %46 = sbr.rel (0) target = $region49
  $region48: #{mm_link_predictor_forward.1} parent=0 // pred_region
    _
  $region49: #{mm_link_predictor_forward.1} parent=0 // pred_fallthru
    _
  // Predicated region
  $region50: #{mm_link_predictor_forward.1} parent=0 // pred_check
    _
  $region51: #{mm_link_predictor_forward.1} parent=0 // pred_check_branch
    %48 = sbr.rel (0) target = $region53
  $region52: #{mm_link_predictor_forward.1} parent=0 // pred_region
    _
  $region53: #{mm_link_predictor_forward.1} parent=0 // pred_fallthru
    _
  // Predicated region
  $region54: #{mm_link_predictor_forward.1} parent=0 // pred_check
    _
  $region55: #{mm_link_predictor_forward.1} parent=0 // pred_check_branch
    %50 = sbr.rel (0) target = $region57
  $region56: #{mm_link_predictor_forward.1} parent=0 // pred_region
    _
  $region57: #{mm_link_predictor_forward.1} parent=0 // pred_fallthru
    _
  // Predicated region
  $region58: #{mm_link_predictor_forward.1} parent=0 // pred_check
    _
  $region59: #{mm_link_predictor_forward.1} parent=0 // pred_check_branch
    %52 = sbr.rel (0) target = $region61
  $region60: #{mm_link_predictor_forward.1} parent=0 // pred_region
    _
  $region61: #{mm_link_predictor_forward.1} parent=0 // pred_fallthru
    _
  // Predicated region
  $region62: #{mm_link_predictor_forward.1} parent=0 // pred_check
    _
  $region63: #{mm_link_predictor_forward.1} parent=0 // pred_check_branch
    %54 = sbr.rel (0) target = $region65
  $region64: #{mm_link_predictor_forward.1} parent=0 // pred_region
    _
  $region65: #{mm_link_predictor_forward.1} parent=0 // pred_fallthru
    _
  %v56 = vld [vmem:[%s0] sm:$0xff]
  %v57 = vld [vmem:[%s0 + $0x8] sm:$0xff]
  %v58 = vld [vmem:[%s0 + $0x10] sm:$0xff]
  %v59 = vld [vmem:[%s0 + $0x18] sm:$0xff]
  %v60 = vld [vmem:[%s0 + $0x20] sm:$0xff]
  %v61 = vld [vmem:[%s0 + $0x28] sm:$0xff]
  %v62 = vld [vmem:[%s1] sm:$0x1]
  %v64 = vlaneseq
  %v65 = vshrl.u32 %v64, 7
  %v66 = vsub.s32 0, %v65
  %v67 = vrot.slane %v62, %v66
  %v69 = vsub.f32 %v56, %v67
  %v70 = vsub.f32 %v57, %v67
  %v71 = vsub.f32 %v58, %v67
  %v72 = vsub.f32 %v59, %v67
  %v73 = vsub.f32 %v60, %v67
  %v74 = vsub.f32 %v61, %v67
  %v75 = vld [vmem:[%s2] sm:$0x1]
  %v76 = vadd.f32 %v75, 1e-05
  %v77 = vrsqrt.pop %v76
  %v79 = vlaneseq
  %v80 = vshrl.u32 %v79, 7
  %v81 = vsub.s32 0, %v80
  %v82 = vrot.slane %v77, %v81
  %v84 = vmul.f32 %v69, %v82
  %v85 = vmul.f32 %v70, %v82
  %v86 = vmul.f32 %v71, %v82
  %v87 = vmul.f32 %v72, %v82
  %v88 = vmul.f32 %v73, %v82
  %v89 = vmul.f32 %v74, %v82
  %v90 = vpack.c.bf16 %v85, %v84
  %v91 = vpack.c.bf16 %v87, %v86
  %v92 = vpack.c.bf16 %v89, %v88
  %v93 = vld [vmem:[%s3] sm:$0xf]
  %v94 = vld [vmem:[%s3 + $0x4] sm:$0xf]
  %v95 = vld [vmem:[%s3 + $0x8] sm:$0xf]
  %v96 = vld [vmem:[%s3 + $0xc] sm:$0xf]
  %v97 = vld [vmem:[%s3 + $0x10] sm:$0xf]
  %v98 = vld [vmem:[%s3 + $0x14] sm:$0xf]
  %v99 = vld [vmem:[%s3 + $0x18] sm:$0xf]
  %v100 = vld [vmem:[%s3 + $0x1c] sm:$0xf]
  %v101 = vld [vmem:[%s3 + $0x20] sm:$0xf]
  %v102 = vld [vmem:[%s3 + $0x24] sm:$0xf]
  %v103 = vld [vmem:[%s3 + $0x28] sm:$0xf]
  %v104 = vld [vmem:[%s3 + $0x2c] sm:$0xf]
  %v105 = vld [vmem:[%s3 + $0x30] sm:$0xf]
  %v106 = vld [vmem:[%s3 + $0x34] sm:$0xf]
  %v107 = vld [vmem:[%s3 + $0x38] sm:$0xf]
  %v108 = vld [vmem:[%s3 + $0x3c] sm:$0xf]
  %v109 = vld [vmem:[%s4] sm:$0x1]
  %v111 = vlaneseq
  %v112 = vshrl.u32 %v111, 7
  %v113 = vsub.s32 0, %v112
  %v114 = vrot.slane %v109, %v113
  %v132 = vunpack.c.l.b16 %v93
  %v133 = vunpack.c.l.b16 %v94
  %v134 = vunpack.c.l.b16 %v95
  %v135 = vunpack.c.l.b16 %v96
  %v136 = vunpack.c.l.b16 %v97
  %v137 = vunpack.c.l.b16 %v98
  %v138 = vunpack.c.l.b16 %v99
  %v139 = vunpack.c.l.b16 %v100
  %v140 = vunpack.c.l.b16 %v101
  %v141 = vunpack.c.l.b16 %v102
  %v142 = vunpack.c.l.b16 %v103
  %v143 = vunpack.c.l.b16 %v104
  %v144 = vunpack.c.l.b16 %v105
  %v145 = vunpack.c.l.b16 %v106
  %v146 = vunpack.c.l.b16 %v107
  %v147 = vunpack.c.l.b16 %v108
  %v148 = vpack.c.b16 %v133, %v132
  %v149 = vpack.c.b16 %v135, %v134
  %v150 = vpack.c.b16 %v137, %v136
  %v151 = vpack.c.b16 %v139, %v138
  %v152 = vpack.c.b16 %v141, %v140
  %v153 = vpack.c.b16 %v143, %v142
  %v154 = vpack.c.b16 %v145, %v144
  %v155 = vpack.c.b16 %v147, %v146
  %164 = vmatprep.subr.bf16.mxu0 0
  %165 = vmatpush1.bf16.msra.mxu0 %v148
  %166 = vmatprep.subr.bf16.mxu0 0
  %167 = vmatpush1.bf16.msra.mxu0 %v149
  %168 = vmatprep.subr.bf16.mxu0 0
  %169 = vmatpush1.bf16.msra.mxu0 %v150
  %170 = vmatprep.subr.bf16.mxu0 0
  %171 = vmatpush1.bf16.msra.mxu0 %v151
  %172 = vmatprep.subr.bf16.mxu0 0
  %173 = vmatpush1.bf16.msra.mxu0 %v152
  %174 = vmatprep.subr.bf16.mxu0 0
  %175 = vmatpush1.bf16.msra.mxu0 %v153
  %176 = vmatprep.subr.bf16.mxu0 0
  %177 = vmatpush1.bf16.msra.mxu0 %v154
  %178 = vmatprep.subr.bf16.mxu0 0
  %179 = vmatpush1.bf16.msra.mxu0 %v155
  %180 = vmatprep.subr.bf16.mxu0 0
  %181 = vmatpush1.bf16.msra.mxu0 0
  %182 = vmatprep.subr.bf16.mxu0 0
  %183 = vmatpush1.bf16.msra.mxu0 0
  %184 = vmatprep.subr.bf16.mxu0 0
  %185 = vmatpush1.bf16.msra.mxu0 0
  %186 = vmatprep.subr.bf16.mxu0 0
  %187 = vmatpush1.bf16.msra.mxu0 0
  %188 = vmatprep.subr.bf16.mxu0 0
  %189 = vmatpush1.bf16.msra.mxu0 0
  %190 = vmatprep.subr.bf16.mxu0 0
  %191 = vmatpush1.bf16.msra.mxu0 0
  %192 = vmatprep.subr.bf16.mxu0 0
  %193 = vmatpush1.bf16.msra.mxu0 0
  %194 = vmatprep.subr.bf16.mxu0 0
  %195 = vmatpush1.bf16.msra.mxu0 0
  %196 = vmatprep.mubr.bf16.mxu0 0
  %197 = vmatmul.mubr.bf16.gmra.mrb[0].mxu0 %v90
  %v198 = vpop.f32.mrb[0].mxu0
  %v199 = vadd.f32 %v114, %v198
  %v200 = vpop.f32.mrb[0].mxu0
  %v201 = vpop.f32.mrb[0].mxu0
  %v202 = vadd.f32 %v114, %v201
  %v203 = vpop.f32.mrb[0].mxu0
  %204 = vmatprep.mubr.bf16.mxu0 0
  %205 = vmatmul.mubr.bf16.gmra.mrb[0].mxu0 %v91
  %v206 = vpop.f32.mrb[0].mxu0
  %v207 = vadd.f32 %v114, %v206
  %v208 = vpop.f32.mrb[0].mxu0
  %v209 = vpop.f32.mrb[0].mxu0
  %v210 = vadd.f32 %v114, %v209
  %v211 = vpop.f32.mrb[0].mxu0
  %212 = vmatprep.mubr.bf16.mxu0 0
  %213 = vmatmul.mubr.bf16.gmra.mrb[0].mxu0 %v92
  %v214 = vpop.f32.mrb[0].mxu0
  %v215 = vadd.f32 %v114, %v214
  %v216 = vpop.f32.mrb[0].mxu0
  %v217 = vpop.f32.mrb[0].mxu0
  %v218 = vadd.f32 %v114, %v217
  %v219 = vpop.f32.mrb[0].mxu0
  %220 = vdwg.mxu0
  %v221 = vmax.f32 %v199, 0.0
  %v222 = vmax.f32 %v202, 0.0
  %v223 = vmax.f32 %v207, 0.0
  %v224 = vmax.f32 %v210, 0.0
  %v225 = vmax.f32 %v215, 0.0
  %v226 = vmax.f32 %v218, 0.0
  %v227 = vpack.c.bf16 %v222, %v221
  %v228 = vpack.c.bf16 %v224, %v223
  %v229 = vpack.c.bf16 %v226, %v225
  %v230 = vld [vmem:[%s5] sm:$0xf]
  %v231 = vld [vmem:[%s5 + $0x4] sm:$0xf]
  %v232 = vld [vmem:[%s5 + $0x8] sm:$0xf]
  %v233 = vld [vmem:[%s5 + $0xc] sm:$0xf]
  %v234 = vld [vmem:[%s5 + $0x10] sm:$0xf]
  %v235 = vld [vmem:[%s5 + $0x14] sm:$0xf]
  %v236 = vld [vmem:[%s5 + $0x18] sm:$0xf]
  %v237 = vld [vmem:[%s5 + $0x1c] sm:$0xf]
  %v238 = vld [vmem:[%s5 + $0x20] sm:$0xf]
  %v239 = vld [vmem:[%s5 + $0x24] sm:$0xf]
  %v240 = vld [vmem:[%s5 + $0x28] sm:$0xf]
  %v241 = vld [vmem:[%s5 + $0x2c] sm:$0xf]
  %v242 = vld [vmem:[%s5 + $0x30] sm:$0xf]
  %v243 = vld [vmem:[%s5 + $0x34] sm:$0xf]
  %v244 = vld [vmem:[%s5 + $0x38] sm:$0xf]
  %v245 = vld [vmem:[%s5 + $0x3c] sm:$0xf]
  %v246 = vld [vmem:[%s6] sm:$0x1]
  %v248 = vlaneseq
  %v249 = vshrl.u32 %v248, 7
  %v250 = vsub.s32 0, %v249
  %v251 = vrot.slane %v246, %v250
  %v269 = vunpack.c.l.b16 %v230
  %v270 = vunpack.c.l.b16 %v231
  %v271 = vunpack.c.l.b16 %v232
  %v272 = vunpack.c.l.b16 %v233
  %v273 = vunpack.c.l.b16 %v234
  %v274 = vunpack.c.l.b16 %v235
  %v275 = vunpack.c.l.b16 %v236
  %v276 = vunpack.c.l.b16 %v237
  %v277 = vunpack.c.l.b16 %v238
  %v278 = vunpack.c.l.b16 %v239
  %v279 = vunpack.c.l.b16 %v240
  %v280 = vunpack.c.l.b16 %v241
  %v281 = vunpack.c.l.b16 %v242
  %v282 = vunpack.c.l.b16 %v243
  %v283 = vunpack.c.l.b16 %v244
  %v284 = vunpack.c.l.b16 %v245
  %v285 = vpack.c.b16 %v270, %v269
  %v286 = vpack.c.b16 %v272, %v271
  %v287 = vpack.c.b16 %v274, %v273
  %v288 = vpack.c.b16 %v276, %v275
  %v289 = vpack.c.b16 %v278, %v277
  %v290 = vpack.c.b16 %v280, %v279
  %v291 = vpack.c.b16 %v282, %v281
  %v292 = vpack.c.b16 %v284, %v283
  %301 = vmatprep.subr.bf16.mxu0 0
  %302 = vmatpush1.bf16.msra.mxu0 %v285
  %303 = vmatprep.subr.bf16.mxu0 0
  %304 = vmatpush1.bf16.msra.mxu0 %v286
  %305 = vmatprep.subr.bf16.mxu0 0
  %306 = vmatpush1.bf16.msra.mxu0 %v287
  %307 = vmatprep.subr.bf16.mxu0 0
  %308 = vmatpush1.bf16.msra.mxu0 %v288
  %309 = vmatprep.subr.bf16.mxu0 0
  %310 = vmatpush1.bf16.msra.mxu0 %v289
  %311 = vmatprep.subr.bf16.mxu0 0
  %312 = vmatpush1.bf16.msra.mxu0 %v290
  %313 = vmatprep.subr.bf16.mxu0 0
  %314 = vmatpush1.bf16.msra.mxu0 %v291
  %315 = vmatprep.subr.bf16.mxu0 0
  %316 = vmatpush1.bf16.msra.mxu0 %v292
  %317 = vmatprep.subr.bf16.mxu0 0
  %318 = vmatpush1.bf16.msra.mxu0 0
  %319 = vmatprep.subr.bf16.mxu0 0
  %320 = vmatpush1.bf16.msra.mxu0 0
  %321 = vmatprep.subr.bf16.mxu0 0
  %322 = vmatpush1.bf16.msra.mxu0 0
  %323 = vmatprep.subr.bf16.mxu0 0
  %324 = vmatpush1.bf16.msra.mxu0 0
  %325 = vmatprep.subr.bf16.mxu0 0
  %326 = vmatpush1.bf16.msra.mxu0 0
  %327 = vmatprep.subr.bf16.mxu0 0
  %328 = vmatpush1.bf16.msra.mxu0 0
  %329 = vmatprep.subr.bf16.mxu0 0
  %330 = vmatpush1.bf16.msra.mxu0 0
  %331 = vmatprep.subr.bf16.mxu0 0
  %332 = vmatpush1.bf16.msra.mxu0 0
  %333 = vmatprep.mubr.bf16.mxu0 0
  %334 = vmatmul.mubr.bf16.gmra.mrb[0].mxu0 %v227
  %v335 = vpop.f32.mrb[0].mxu0
  %v336 = vadd.f32 %v251, %v335
  %v337 = vpop.f32.mrb[0].mxu0
  %v338 = vpop.f32.mrb[0].mxu0
  %v339 = vadd.f32 %v251, %v338
  %v340 = vpop.f32.mrb[0].mxu0
  %341 = vmatprep.mubr.bf16.mxu0 0
  %342 = vmatmul.mubr.bf16.gmra.mrb[0].mxu0 %v228
  %v343 = vpop.f32.mrb[0].mxu0
  %v344 = vadd.f32 %v251, %v343
  %v345 = vpop.f32.mrb[0].mxu0
  %v346 = vpop.f32.mrb[0].mxu0
  %v347 = vadd.f32 %v251, %v346
  %v348 = vpop.f32.mrb[0].mxu0
  %349 = vmatprep.mubr.bf16.mxu0 0
  %350 = vmatmul.mubr.bf16.gmra.mrb[0].mxu0 %v229
  %v351 = vpop.f32.mrb[0].mxu0
  %v352 = vadd.f32 %v251, %v351
  %v353 = vpop.f32.mrb[0].mxu0
  %v354 = vpop.f32.mrb[0].mxu0
  %v355 = vadd.f32 %v251, %v354
  %v356 = vpop.f32.mrb[0].mxu0
  %357 = vdwg.mxu0
  %v358 = vld [vmem:[%s7] sm:$0xff]
  %v359 = vld [vmem:[%s7 + $0x8] sm:$0xff]
  %v360 = vld [vmem:[%s7 + $0x10] sm:$0xff]
  %v361 = vld [vmem:[%s7 + $0x18] sm:$0xff]
  %v362 = vld [vmem:[%s7 + $0x20] sm:$0xff]
  %v363 = vld [vmem:[%s7 + $0x28] sm:$0xff]
  %v364 = vld [vmem:[%s7 + $0x30] sm:$0xff]
  %v365 = vld [vmem:[%s7 + $0x38] sm:$0xff]
  %v366 = vld [vmem:[%s7 + $0x40] sm:$0xff]
  %v367 = vld [vmem:[%s7 + $0x48] sm:$0xff]
  %v368 = vld [vmem:[%s7 + $0x50] sm:$0xff]
  %v369 = vld [vmem:[%s7 + $0x58] sm:$0xff]
  %v370 = vld [vmem:[%s7 + $0x60] sm:$0xff]
  %v371 = vld [vmem:[%s7 + $0x68] sm:$0xff]
  %v372 = vld [vmem:[%s7 + $0x70] sm:$0xff]
  %v373 = vld [vmem:[%s7 + $0x78] sm:$0xff]
  %374 = vmatprep.subr.mxu0 0.0
  %375 = vmatpush1.msra.mxu0 %v358
  %376 = vmatprep.subr.mxu0 0.0
  %377 = vmatpush1.msra.mxu0 %v359
  %378 = vmatprep.subr.mxu0 0.0
  %379 = vmatpush1.msra.mxu0 %v360
  %380 = vmatprep.subr.mxu0 0.0
  %381 = vmatpush1.msra.mxu0 %v361
  %382 = vmatprep.subr.mxu0 0.0
  %383 = vmatpush1.msra.mxu0 %v362
  %384 = vmatprep.subr.mxu0 0.0
  %385 = vmatpush1.msra.mxu0 %v363
  %386 = vmatprep.subr.mxu0 0.0
  %387 = vmatpush1.msra.mxu0 %v364
  %388 = vmatprep.subr.mxu0 0.0
  %389 = vmatpush1.msra.mxu0 %v365
  %390 = vmatprep.subr.mxu0 0.0
  %391 = vmatpush1.msra.mxu0 %v366
  %392 = vmatprep.subr.mxu0 0.0
  %393 = vmatpush1.msra.mxu0 %v367
  %394 = vmatprep.subr.mxu0 0.0
  %395 = vmatpush1.msra.mxu0 %v368
  %396 = vmatprep.subr.mxu0 0.0
  %397 = vmatpush1.msra.mxu0 %v369
  %398 = vmatprep.subr.mxu0 0.0
  %399 = vmatpush1.msra.mxu0 %v370
  %400 = vmatprep.subr.mxu0 0.0
  %401 = vmatpush1.msra.mxu0 %v371
  %402 = vmatprep.subr.mxu0 0.0
  %403 = vmatpush1.msra.mxu0 %v372
  %404 = vmatprep.subr.mxu0 0.0
  %405 = vmatpush1.msra.mxu0 %v373
  %406 = vmatprep.subr.mxu0 0.0
  %407 = vmatpush1.msra.mxu0 0.0
  %408 = vmatprep.subr.mxu0 0.0
  %409 = vmatpush1.msra.mxu0 0.0
  %410 = vmatprep.subr.mxu0 0.0
  %411 = vmatpush1.msra.mxu0 0.0
  %412 = vmatprep.subr.mxu0 0.0
  %413 = vmatpush1.msra.mxu0 0.0
  %414 = vmatprep.subr.mxu0 0.0
  %415 = vmatpush1.msra.mxu0 0.0
  %416 = vmatprep.subr.mxu0 0.0
  %417 = vmatpush1.msra.mxu0 0.0
  %418 = vmatprep.subr.mxu0 0.0
  %419 = vmatpush1.msra.mxu0 0.0
  %420 = vmatprep.subr.mxu0 0.0
  %421 = vmatpush1.msra.mxu0 0.0
  %422 = vmatprep.subr.mxu0 0.0
  %423 = vmatpush1.msra.mxu0 0.0
  %424 = vmatprep.subr.mxu0 0.0
  %425 = vmatpush1.msra.mxu0 0.0
  %426 = vmatprep.subr.mxu0 0.0
  %427 = vmatpush1.msra.mxu0 0.0
  %428 = vmatprep.subr.mxu0 0.0
  %429 = vmatpush1.msra.mxu0 0.0
  %430 = vmatprep.subr.mxu0 0.0
  %431 = vmatpush1.msra.mxu0 0.0
  %432 = vmatprep.subr.mxu0 0.0
  %433 = vmatpush1.msra.mxu0 0.0
  %434 = vmatprep.subr.mxu0 0.0
  %435 = vmatpush1.msra.mxu0 0.0
  %436 = vmatprep.subr.mxu0 0.0
  %437 = vmatpush1.msra.mxu0 0.0
  %438 = vmatprep.mubr.f32.mxu0 0.0
  %439 = vmatmul.mubr.f32.gmra.mrb[0].mxu0 %v336
  %v440 = vpop.f32.mrb[0].mxu0
  %v441 = vadd.f32 0.0, %v440
  %v442 = vpop.f32.mrb[0].mxu0
  %443 = vmatprep.mubr.f32.mxu0 0.0
  %444 = vmatmul.mubr.f32.gmra.mrb[0].mxu0 %v339
  %v445 = vpop.f32.mrb[0].mxu0
  %v446 = vadd.f32 0.0, %v445
  %v447 = vpop.f32.mrb[0].mxu0
  %448 = vmatprep.mubr.f32.mxu0 0.0
  %449 = vmatmul.mubr.f32.gmra.mrb[0].mxu0 %v344
  %v450 = vpop.f32.mrb[0].mxu0
  %v451 = vadd.f32 0.0, %v450
  %v452 = vpop.f32.mrb[0].mxu0
  %453 = vmatprep.mubr.f32.mxu0 0.0
  %454 = vmatmul.mubr.f32.gmra.mrb[0].mxu0 %v347
  %v455 = vpop.f32.mrb[0].mxu0
  %v456 = vadd.f32 0.0, %v455
  %v457 = vpop.f32.mrb[0].mxu0
  %458 = vmatprep.mubr.f32.mxu0 0.0
  %459 = vmatmul.mubr.f32.gmra.mrb[0].mxu0 %v352
  %v460 = vpop.f32.mrb[0].mxu0
  %v461 = vadd.f32 0.0, %v460
  %v462 = vpop.f32.mrb[0].mxu0
  %463 = vmatprep.mubr.f32.mxu0 0.0
  %464 = vmatmul.mubr.f32.gmra.mrb[0].mxu0 %v355
  %v465 = vpop.f32.mrb[0].mxu0
  %v466 = vadd.f32 0.0, %v465
  %v467 = vpop.f32.mrb[0].mxu0
  %468 = vdwg.mxu0
  %v469 = vsub.f32 %v336, %v441
  %v470 = vsub.f32 %v339, %v446
  %v471 = vsub.f32 %v344, %v451
  %v472 = vsub.f32 %v347, %v456
  %v473 = vsub.f32 %v352, %v461
  %v474 = vsub.f32 %v355, %v466
  %v475 = vmul.f32 %v469, %v469
  %v476 = vmul.f32 %v470, %v470
  %v477 = vmul.f32 %v471, %v471
  %v478 = vmul.f32 %v472, %v472
  %v479 = vmul.f32 %v473, %v473
  %v480 = vmul.f32 %v474, %v474
  %481 = vmatprep.subr.mxu0 0.0
  %482 = vmatpush1.msra.mxu0 %v358
  %483 = vmatprep.subr.mxu0 0.0
  %484 = vmatpush1.msra.mxu0 %v359
  %485 = vmatprep.subr.mxu0 0.0
  %486 = vmatpush1.msra.mxu0 %v360
  %487 = vmatprep.subr.mxu0 0.0
  %488 = vmatpush1.msra.mxu0 %v361
  %489 = vmatprep.subr.mxu0 0.0
  %490 = vmatpush1.msra.mxu0 %v362
  %491 = vmatprep.subr.mxu0 0.0
  %492 = vmatpush1.msra.mxu0 %v363
  %493 = vmatprep.subr.mxu0 0.0
  %494 = vmatpush1.msra.mxu0 %v364
  %495 = vmatprep.subr.mxu0 0.0
  %496 = vmatpush1.msra.mxu0 %v365
  %497 = vmatprep.subr.mxu0 0.0
  %498 = vmatpush1.msra.mxu0 %v366
  %499 = vmatprep.subr.mxu0 0.0
  %500 = vmatpush1.msra.mxu0 %v367
  %501 = vmatprep.subr.mxu0 0.0
  %502 = vmatpush1.msra.mxu0 %v368
  %503 = vmatprep.subr.mxu0 0.0
  %504 = vmatpush1.msra.mxu0 %v369
  %505 = vmatprep.subr.mxu0 0.0
  %506 = vmatpush1.msra.mxu0 %v370
  %507 = vmatprep.subr.mxu0 0.0
  %508 = vmatpush1.msra.mxu0 %v371
  %509 = vmatprep.subr.mxu0 0.0
  %510 = vmatpush1.msra.mxu0 %v372
  %511 = vmatprep.subr.mxu0 0.0
  %512 = vmatpush1.msra.mxu0 %v373
  %513 = vmatprep.subr.mxu0 0.0
  %514 = vmatpush1.msra.mxu0 0.0
  %515 = vmatprep.subr.mxu0 0.0
  %516 = vmatpush1.msra.mxu0 0.0
  %517 = vmatprep.subr.mxu0 0.0
  %518 = vmatpush1.msra.mxu0 0.0
  %519 = vmatprep.subr.mxu0 0.0
  %520 = vmatpush1.msra.mxu0 0.0
  %521 = vmatprep.subr.mxu0 0.0
  %522 = vmatpush1.msra.mxu0 0.0
  %523 = vmatprep.subr.mxu0 0.0
  %524 = vmatpush1.msra.mxu0 0.0
  %525 = vmatprep.subr.mxu0 0.0
  %526 = vmatpush1.msra.mxu0 0.0
  %527 = vmatprep.subr.mxu0 0.0
  %528 = vmatpush1.msra.mxu0 0.0
  %529 = vmatprep.subr.mxu0 0.0
  %530 = vmatpush1.msra.mxu0 0.0
  %531 = vmatprep.subr.mxu0 0.0
  %532 = vmatpush1.msra.mxu0 0.0
  %533 = vmatprep.subr.mxu0 0.0
  %534 = vmatpush1.msra.mxu0 0.0
  %535 = vmatprep.subr.mxu0 0.0
  %536 = vmatpush1.msra.mxu0 0.0
  %537 = vmatprep.subr.mxu0 0.0
  %538 = vmatpush1.msra.mxu0 0.0
  %539 = vmatprep.subr.mxu0 0.0
  %540 = vmatpush1.msra.mxu0 0.0
  %541 = vmatprep.subr.mxu0 0.0
  %542 = vmatpush1.msra.mxu0 0.0
  %543 = vmatprep.subr.mxu0 0.0
  %544 = vmatpush1.msra.mxu0 0.0
  %545 = vmatprep.mubr.f32.mxu0 0.0
  %546 = vmatmul.mubr.f32.gmra.mrb[0].mxu0 %v475
  %v547 = vpop.f32.mrb[0].mxu0
  %v548 = vadd.f32 1e-05, %v547
  %v549 = vpop.f32.mrb[0].mxu0
  %550 = vmatprep.mubr.f32.mxu0 0.0
  %551 = vmatmul.mubr.f32.gmra.mrb[0].mxu0 %v476
  %v552 = vpop.f32.mrb[0].mxu0
  %v553 = vadd.f32 1e-05, %v552
  %v554 = vpop.f32.mrb[0].mxu0
  %555 = vmatprep.mubr.f32.mxu0 0.0
  %556 = vmatmul.mubr.f32.gmra.mrb[0].mxu0 %v477
  %v557 = vpop.f32.mrb[0].mxu0
  %v558 = vadd.f32 1e-05, %v557
  %v559 = vpop.f32.mrb[0].mxu0
  %560 = vmatprep.mubr.f32.mxu0 0.0
  %561 = vmatmul.mubr.f32.gmra.mrb[0].mxu0 %v478
  %v562 = vpop.f32.mrb[0].mxu0
  %v563 = vadd.f32 1e-05, %v562
  %v564 = vpop.f32.mrb[0].mxu0
  %565 = vmatprep.mubr.f32.mxu0 0.0
  %566 = vmatmul.mubr.f32.gmra.mrb[0].mxu0 %v479
  %v567 = vpop.f32.mrb[0].mxu0
  %v568 = vadd.f32 1e-05, %v567
  %v569 = vpop.f32.mrb[0].mxu0
  %570 = vmatprep.mubr.f32.mxu0 0.0
  %571 = vmatmul.mubr.f32.gmra.mrb[0].mxu0 %v480
  %v572 = vpop.f32.mrb[0].mxu0
  %v573 = vadd.f32 1e-05, %v572
  %v574 = vpop.f32.mrb[0].mxu0
  %575 = vdwg.mxu0
  %v576 = vrsqrt.pop %v548
  %v577 = vrsqrt.pop %v553
  %v578 = vrsqrt.pop %v558
  %v579 = vrsqrt.pop %v563
  %v580 = vrsqrt.pop %v568
  %v581 = vrsqrt.pop %v573
  %v582 = vmul.f32 %v469, %v576
  %v583 = vmul.f32 %v470, %v577
  %v584 = vmul.f32 %v471, %v578
  %v585 = vmul.f32 %v472, %v579
  %v586 = vmul.f32 %v473, %v580
  %v587 = vmul.f32 %v474, %v581
  %v588 = vpack.c.bf16 %v583, %v582
  %v589 = vpack.c.bf16 %v585, %v584
  %v590 = vpack.c.bf16 %v587, %v586
  %v591 = vld [vmem:[%s8] sm:$0xf]
  %v592 = vld [vmem:[%s8 + $0x4] sm:$0xf]
  %v593 = vld [vmem:[%s8 + $0x8] sm:$0xf]
  %v594 = vld [vmem:[%s8 + $0xc] sm:$0xf]
  %v595 = vld [vmem:[%s8 + $0x10] sm:$0xf]
  %v596 = vld [vmem:[%s8 + $0x14] sm:$0xf]
  %v597 = vld [vmem:[%s8 + $0x18] sm:$0xf]
  %v598 = vld [vmem:[%s8 + $0x1c] sm:$0xf]
  %v599 = vld [vmem:[%s8 + $0x20] sm:$0xf]
  %v600 = vld [vmem:[%s8 + $0x24] sm:$0xf]
  %v601 = vld [vmem:[%s8 + $0x28] sm:$0xf]
  %v602 = vld [vmem:[%s8 + $0x2c] sm:$0xf]
  %v603 = vld [vmem:[%s8 + $0x30] sm:$0xf]
  %v604 = vld [vmem:[%s8 + $0x34] sm:$0xf]
  %v605 = vld [vmem:[%s8 + $0x38] sm:$0xf]
  %v606 = vld [vmem:[%s8 + $0x3c] sm:$0xf]
  %v607 = vld [vmem:[%s9] sm:$0x1]
  %v609 = vlaneseq
  %v610 = vshrl.u32 %v609, 7
  %v611 = vsub.s32 0, %v610
  %v612 = vrot.slane %v607, %v611
  %v630 = vunpack.c.l.b16 %v591
  %v631 = vunpack.c.l.b16 %v592
  %v632 = vunpack.c.l.b16 %v593
  %v633 = vunpack.c.l.b16 %v594
  %v634 = vunpack.c.l.b16 %v595
  %v635 = vunpack.c.l.b16 %v596
  %v636 = vunpack.c.l.b16 %v597
  %v637 = vunpack.c.l.b16 %v598
  %v638 = vunpack.c.l.b16 %v599
  %v639 = vunpack.c.l.b16 %v600
  %v640 = vunpack.c.l.b16 %v601
  %v641 = vunpack.c.l.b16 %v602
  %v642 = vunpack.c.l.b16 %v603
  %v643 = vunpack.c.l.b16 %v604
  %v644 = vunpack.c.l.b16 %v605
  %v645 = vunpack.c.l.b16 %v606
  %v646 = vpack.c.b16 %v631, %v630
  %v647 = vpack.c.b16 %v633, %v632
  %v648 = vpack.c.b16 %v635, %v634
  %v649 = vpack.c.b16 %v637, %v636
  %v650 = vpack.c.b16 %v639, %v638
  %v651 = vpack.c.b16 %v641, %v640
  %v652 = vpack.c.b16 %v643, %v642
  %v653 = vpack.c.b16 %v645, %v644
  %662 = vmatprep.subr.bf16.mxu0 0
  %663 = vmatpush1.bf16.msra.mxu0 %v646
  %664 = vmatprep.subr.bf16.mxu0 0
  %665 = vmatpush1.bf16.msra.mxu0 %v647
  %666 = vmatprep.subr.bf16.mxu0 0
  %667 = vmatpush1.bf16.msra.mxu0 %v648
  %668 = vmatprep.subr.bf16.mxu0 0
  %669 = vmatpush1.bf16.msra.mxu0 %v649
  %670 = vmatprep.subr.bf16.mxu0 0
  %671 = vmatpush1.bf16.msra.mxu0 %v650
  %672 = vmatprep.subr.bf16.mxu0 0
  %673 = vmatpush1.bf16.msra.mxu0 %v651
  %674 = vmatprep.subr.bf16.mxu0 0
  %675 = vmatpush1.bf16.msra.mxu0 %v652
  %676 = vmatprep.subr.bf16.mxu0 0
  %677 = vmatpush1.bf16.msra.mxu0 %v653
  %678 = vmatprep.subr.bf16.mxu0 0
  %679 = vmatpush1.bf16.msra.mxu0 0
  %680 = vmatprep.subr.bf16.mxu0 0
  %681 = vmatpush1.bf16.msra.mxu0 0
  %682 = vmatprep.subr.bf16.mxu0 0
  %683 = vmatpush1.bf16.msra.mxu0 0
  %684 = vmatprep.subr.bf16.mxu0 0
  %685 = vmatpush1.bf16.msra.mxu0 0
  %686 = vmatprep.subr.bf16.mxu0 0
  %687 = vmatpush1.bf16.msra.mxu0 0
  %688 = vmatprep.subr.bf16.mxu0 0
  %689 = vmatpush1.bf16.msra.mxu0 0
  %690 = vmatprep.subr.bf16.mxu0 0
  %691 = vmatpush1.bf16.msra.mxu0 0
  %692 = vmatprep.subr.bf16.mxu0 0
  %693 = vmatpush1.bf16.msra.mxu0 0
  %694 = vmatprep.mubr.bf16.mxu0 0
  %695 = vmatmul.mubr.bf16.gmra.mrb[0].mxu0 %v588
  %v696 = vpop.f32.mrb[0].mxu0
  %v697 = vadd.f32 %v612, %v696
  %v698 = vpop.f32.mrb[0].mxu0
  %v699 = vpop.f32.mrb[0].mxu0
  %v700 = vadd.f32 %v612, %v699
  %v701 = vpop.f32.mrb[0].mxu0
  %702 = vmatprep.mubr.bf16.mxu0 0
  %703 = vmatmul.mubr.bf16.gmra.mrb[0].mxu0 %v589
  %v704 = vpop.f32.mrb[0].mxu0
  %v705 = vadd.f32 %v612, %v704
  %v706 = vpop.f32.mrb[0].mxu0
  %v707 = vpop.f32.mrb[0].mxu0
  %v708 = vadd.f32 %v612, %v707
  %v709 = vpop.f32.mrb[0].mxu0
  %710 = vmatprep.mubr.bf16.mxu0 0
  %711 = vmatmul.mubr.bf16.gmra.mrb[0].mxu0 %v590
  %v712 = vpop.f32.mrb[0].mxu0
  %v713 = vadd.f32 %v612, %v712
  %v714 = vpop.f32.mrb[0].mxu0
  %v715 = vpop.f32.mrb[0].mxu0
  %v716 = vadd.f32 %v612, %v715
  %v717 = vpop.f32.mrb[0].mxu0
  %718 = vdwg.mxu0
  %v719 = vmax.f32 %v697, 0.0
  %v720 = vmax.f32 %v700, 0.0
  %v721 = vmax.f32 %v705, 0.0
  %v722 = vmax.f32 %v708, 0.0
  %v723 = vmax.f32 %v713, 0.0
  %v724 = vmax.f32 %v716, 0.0
  %v725 = vld [vmem:[%s10] sm:$0xff]
  %v726 = vld [vmem:[%s10 + $0x8] sm:$0xff]
  %v727 = vld [vmem:[%s10 + $0x10] sm:$0xff]
  %v728 = vld [vmem:[%s10 + $0x18] sm:$0xff]
  %v729 = vld [vmem:[%s10 + $0x20] sm:$0xff]
  %v730 = vld [vmem:[%s10 + $0x28] sm:$0xff]
  %v731 = vadd.f32 %v719, %v725
  %v732 = vadd.f32 %v720, %v726
  %v733 = vadd.f32 %v721, %v727
  %v734 = vadd.f32 %v722, %v728
  %v735 = vadd.f32 %v723, %v729
  %v736 = vadd.f32 %v724, %v730
  %v737 = vpack.c.bf16 %v732, %v731
  %v738 = vpack.c.bf16 %v734, %v733
  %v739 = vpack.c.bf16 %v736, %v735
  %v740 = vld [vmem:[%s11] sm:$0xf]
  %v741 = vld [vmem:[%s11 + $0x4] sm:$0xf]
  %v742 = vld [vmem:[%s11 + $0x8] sm:$0xf]
  %v743 = vld [vmem:[%s11 + $0xc] sm:$0xf]
  %v744 = vld [vmem:[%s12] sm:$0x1]
  %v746 = vlaneseq
  %v747 = vshrl.u32 %v746, 7
  %v748 = vsub.s32 0, %v747
  %v749 = vrot.slane %v744, %v748
  %v755 = vunpack.c.l.b16 %v740
  %v756 = vunpack.c.l.b16 %v741
  %v757 = vunpack.c.l.b16 %v742
  %v758 = vunpack.c.l.b16 %v743
  %v759 = vpack.c.b16 %v756, %v755
  %v760 = vpack.c.b16 %v758, %v757
  %vm763 = vcmask 261120
  %v765 = vsel %vm763, %v737, 0
  %v768 = vsel %vm763, %v738, 0
  %v771 = vsel %vm763, %v739, 0
  %773 = vmatprep.subr.bf16.mxu0 0
  %774 = vmatpush1.bf16.msra.mxu0 %v759
  %775 = vmatprep.subr.bf16.mxu0 0
  %776 = vmatpush1.bf16.msra.mxu0 %v760
  %777 = vmatprep.subr.bf16.mxu0 0
  %778 = vmatpush1.bf16.msra.mxu0 0
  %779 = vmatprep.subr.bf16.mxu0 0
  %780 = vmatpush1.bf16.msra.mxu0 0
  %781 = vmatprep.subr.bf16.mxu0 0
  %782 = vmatpush1.bf16.msra.mxu0 0
  %783 = vmatprep.subr.bf16.mxu0 0
  %784 = vmatpush1.bf16.msra.mxu0 0
  %785 = vmatprep.subr.bf16.mxu0 0
  %786 = vmatpush1.bf16.msra.mxu0 0
  %787 = vmatprep.subr.bf16.mxu0 0
  %788 = vmatpush1.bf16.msra.mxu0 0
  %789 = vmatprep.subr.bf16.mxu0 0
  %790 = vmatpush1.bf16.msra.mxu0 0
  %791 = vmatprep.subr.bf16.mxu0 0
  %792 = vmatpush1.bf16.msra.mxu0 0
  %793 = vmatprep.subr.bf16.mxu0 0
  %794 = vmatpush1.bf16.msra.mxu0 0
  %795 = vmatprep.subr.bf16.mxu0 0
  %796 = vmatpush1.bf16.msra.mxu0 0
  %797 = vmatprep.subr.bf16.mxu0 0
  %798 = vmatpush1.bf16.msra.mxu0 0
  %799 = vmatprep.subr.bf16.mxu0 0
  %800 = vmatpush1.bf16.msra.mxu0 0
  %801 = vmatprep.subr.bf16.mxu0 0
  %802 = vmatpush1.bf16.msra.mxu0 0
  %803 = vmatprep.subr.bf16.mxu0 0
  %804 = vmatpush1.bf16.msra.mxu0 0
  %805 = vmatprep.mubr.bf16.mxu0 0
  %806 = vmatmul.mubr.bf16.gmra.mrb[0].mxu0 %v765
  %v807 = vpop.f32.mrb[0].mxu0
  %v808 = vadd.f32 %v749, %v807
  %v809 = vpop.f32.mrb[0].mxu0
  %v810 = vpop.f32.mrb[0].mxu0
  %v811 = vadd.f32 %v749, %v810
  %v812 = vpop.f32.mrb[0].mxu0
  %813 = vmatprep.mubr.bf16.mxu0 0
  %814 = vmatmul.mubr.bf16.gmra.mrb[0].mxu0 %v768
  %v815 = vpop.f32.mrb[0].mxu0
  %v816 = vadd.f32 %v749, %v815
  %v817 = vpop.f32.mrb[0].mxu0
  %v818 = vpop.f32.mrb[0].mxu0
  %v819 = vadd.f32 %v749, %v818
  %v820 = vpop.f32.mrb[0].mxu0
  %821 = vmatprep.mubr.bf16.mxu0 0
  %822 = vmatmul.mubr.bf16.gmra.mrb[0].mxu0 %v771
  %v823 = vpop.f32.mrb[0].mxu0
  %v824 = vadd.f32 %v749, %v823
  %v825 = vpop.f32.mrb[0].mxu0
  %v826 = vpop.f32.mrb[0].mxu0
  %v827 = vadd.f32 %v749, %v826
  %v828 = vpop.f32.mrb[0].mxu0
  %829 = vdwg.mxu0
  %v830 = vmax.f32 %v808, 0.0
  %v831 = vmax.f32 %v811, 0.0
  %v832 = vmax.f32 %v816, 0.0
  %v833 = vmax.f32 %v819, 0.0
  %v834 = vmax.f32 %v824, 0.0
  %v835 = vmax.f32 %v827, 0.0
  %v836 = vpack.c.bf16 %v831, %v830
  %v837 = vpack.c.bf16 %v833, %v832
  %v838 = vpack.c.bf16 %v835, %v834
  %v839 = vld [vmem:[%s13] sm:$0xf]
  %v840 = vld [vmem:[%s13 + $0x4] sm:$0xf]
  %v841 = vld [vmem:[%s13 + $0x8] sm:$0xf]
  %v842 = vld [vmem:[%s13 + $0xc] sm:$0xf]
  %v847 = vunpack.c.l.b16 %v839
  %v848 = vunpack.c.l.b16 %v840
  %v849 = vunpack.c.l.b16 %v841
  %v850 = vunpack.c.l.b16 %v842
  %v851 = vpack.c.b16 %v848, %v847
  %v852 = vpack.c.b16 %v850, %v849
  %v856 = vsel %vm763, %v836, 0
  %v859 = vsel %vm763, %v837, 0
  %v862 = vsel %vm763, %v838, 0
  %864 = vmatprep.subr.bf16.mxu0 0
  %865 = vmatpush1.bf16.msra.mxu0 %v851
  %866 = vmatprep.subr.bf16.mxu0 0
  %867 = vmatpush1.bf16.msra.mxu0 %v852
  %868 = vmatprep.subr.bf16.mxu0 0
  %869 = vmatpush1.bf16.msra.mxu0 0
  %870 = vmatprep.subr.bf16.mxu0 0
  %871 = vmatpush1.bf16.msra.mxu0 0
  %872 = vmatprep.subr.bf16.mxu0 0
  %873 = vmatpush1.bf16.msra.mxu0 0
  %874 = vmatprep.subr.bf16.mxu0 0
  %875 = vmatpush1.bf16.msra.mxu0 0
  %876 = vmatprep.subr.bf16.mxu0 0
  %877 = vmatpush1.bf16.msra.mxu0 0
  %878 = vmatprep.subr.bf16.mxu0 0
  %879 = vmatpush1.bf16.msra.mxu0 0
  %880 = vmatprep.subr.bf16.mxu0 0
  %881 = vmatpush1.bf16.msra.mxu0 0
  %882 = vmatprep.subr.bf16.mxu0 0
  %883 = vmatpush1.bf16.msra.mxu0 0
  %884 = vmatprep.subr.bf16.mxu0 0
  %885 = vmatpush1.bf16.msra.mxu0 0
  %886 = vmatprep.subr.bf16.mxu0 0
  %887 = vmatpush1.bf16.msra.mxu0 0
  %888 = vmatprep.subr.bf16.mxu0 0
  %889 = vmatpush1.bf16.msra.mxu0 0
  %890 = vmatprep.subr.bf16.mxu0 0
  %891 = vmatpush1.bf16.msra.mxu0 0
  %892 = vmatprep.subr.bf16.mxu0 0
  %893 = vmatpush1.bf16.msra.mxu0 0
  %894 = vmatprep.subr.bf16.mxu0 0
  %895 = vmatpush1.bf16.msra.mxu0 0
  %896 = vmatprep.mubr.bf16.mxu0 0
  %897 = vmatmul.mubr.bf16.gmra.mrb[0].mxu0 %v856
  %v898 = vpop.f32.mrb[0].mxu0
  %v899 = vadd.f32 0.0, %v898
  %v900 = vpop.f32.mrb[0].mxu0
  %v901 = vpop.f32.mrb[0].mxu0
  %v902 = vadd.f32 0.0, %v901
  %v903 = vpop.f32.mrb[0].mxu0
  %904 = vmatprep.mubr.bf16.mxu0 0
  %905 = vmatmul.mubr.bf16.gmra.mrb[0].mxu0 %v859
  %v906 = vpop.f32.mrb[0].mxu0
  %v907 = vadd.f32 0.0, %v906
  %v908 = vpop.f32.mrb[0].mxu0
  %v909 = vpop.f32.mrb[0].mxu0
  %v910 = vadd.f32 0.0, %v909
  %v911 = vpop.f32.mrb[0].mxu0
  %912 = vmatprep.mubr.bf16.mxu0 0
  %913 = vmatmul.mubr.bf16.gmra.mrb[0].mxu0 %v862
  %v914 = vpop.f32.mrb[0].mxu0
  %v915 = vadd.f32 0.0, %v914
  %v916 = vpop.f32.mrb[0].mxu0
  %v917 = vpop.f32.mrb[0].mxu0
  %v918 = vadd.f32 0.0, %v917
  %v919 = vpop.f32.mrb[0].mxu0
  %920 = vdwg.mxu0
  %v921 = vpack.c.bf16 %v899, %v899
  %v922 = vpack.c.bf16 %v902, %v902
  %v923 = vpack.c.bf16 %v907, %v907
  %v924 = vpack.c.bf16 %v910, %v910
  %v925 = vpack.c.bf16 %v915, %v915
  %v926 = vpack.c.bf16 %v918, %v918
  %v928 = vsel %vm763, %v921, 0
  %930 = vmatprep.subr.bf16.mxu0 0
  %931 = vmatpush1.bf16.xpose.msra.mxu0 %v928
  %932 = vmatprep.subr.bf16.mxu0 0
  %933 = vmatpush1.bf16.xpose.msra.mxu0 0
  %934 = vmatprep.subr.bf16.mxu0 0
  %935 = vmatpush1.bf16.xpose.msra.mxu0 0
  %936 = vmatprep.subr.bf16.mxu0 0
  %937 = vmatpush1.bf16.xpose.msra.mxu0 0
  %938 = vmatprep.subr.bf16.mxu0 0
  %939 = vmatpush1.bf16.xpose.msra.mxu0 0
  %940 = vmatprep.subr.bf16.mxu0 0
  %941 = vmatpush1.bf16.xpose.msra.mxu0 0
  %942 = vmatprep.subr.bf16.mxu0 0
  %943 = vmatpush1.bf16.xpose.msra.mxu0 0
  %944 = vmatprep.subr.bf16.mxu0 0
  %945 = vmatpush1.bf16.xpose.msra.mxu0 0
  %946 = vmatprep.subr.bf16.mxu0 0
  %947 = vmatpush1.bf16.xpose.msra.mxu0 0
  %948 = vmatprep.subr.bf16.mxu0 0
  %949 = vmatpush1.bf16.xpose.msra.mxu0 0
  %950 = vmatprep.subr.bf16.mxu0 0
  %951 = vmatpush1.bf16.xpose.msra.mxu0 0
  %952 = vmatprep.subr.bf16.mxu0 0
  %953 = vmatpush1.bf16.xpose.msra.mxu0 0
  %954 = vmatprep.subr.bf16.mxu0 0
  %955 = vmatpush1.bf16.xpose.msra.mxu0 0
  %956 = vmatprep.subr.bf16.mxu0 0
  %957 = vmatpush1.bf16.xpose.msra.mxu0 0
  %958 = vmatprep.subr.bf16.mxu0 0
  %959 = vmatpush1.bf16.xpose.msra.mxu0 0
  %960 = vmatprep.subr.bf16.mxu0 0
  %961 = vmatpush1.bf16.xpose.msra.mxu0 0
  %962 = vmatprep.mubr.bf16.mxu0 0
  %963 = vmatmul.mubr.bf16.gmra.mrb[0].mxu0 %v928
  %v964 = vpop.f32.mrb[0].mxu0
  %v965 = vadd.f32 0.0, %v964
  %v966 = vpop.f32.mrb[0].mxu0
  %v967 = vpop.f32.mrb[0].mxu0
  %v968 = vpop.f32.mrb[0].mxu0
  %969 = vdwg.mxu0
  %v971 = vsel %vm763, %v922, 0
  %973 = vmatprep.subr.bf16.mxu0 0
  %974 = vmatpush1.bf16.xpose.msra.mxu0 %v971
  %975 = vmatprep.subr.bf16.mxu0 0
  %976 = vmatpush1.bf16.xpose.msra.mxu0 0
  %977 = vmatprep.subr.bf16.mxu0 0
  %978 = vmatpush1.bf16.xpose.msra.mxu0 0
  %979 = vmatprep.subr.bf16.mxu0 0
  %980 = vmatpush1.bf16.xpose.msra.mxu0 0
  %981 = vmatprep.subr.bf16.mxu0 0
  %982 = vmatpush1.bf16.xpose.msra.mxu0 0
  %983 = vmatprep.subr.bf16.mxu0 0
  %984 = vmatpush1.bf16.xpose.msra.mxu0 0
  %985 = vmatprep.subr.bf16.mxu0 0
  %986 = vmatpush1.bf16.xpose.msra.mxu0 0
  %987 = vmatprep.subr.bf16.mxu0 0
  %988 = vmatpush1.bf16.xpose.msra.mxu0 0
  %989 = vmatprep.subr.bf16.mxu0 0
  %990 = vmatpush1.bf16.xpose.msra.mxu0 0
  %991 = vmatprep.subr.bf16.mxu0 0
  %992 = vmatpush1.bf16.xpose.msra.mxu0 0
  %993 = vmatprep.subr.bf16.mxu0 0
  %994 = vmatpush1.bf16.xpose.msra.mxu0 0
  %995 = vmatprep.subr.bf16.mxu0 0
  %996 = vmatpush1.bf16.xpose.msra.mxu0 0
  %997 = vmatprep.subr.bf16.mxu0 0
  %998 = vmatpush1.bf16.xpose.msra.mxu0 0
  %999 = vmatprep.subr.bf16.mxu0 0
  %1000 = vmatpush1.bf16.xpose.msra.mxu0 0
  %1001 = vmatprep.subr.bf16.mxu0 0
  %1002 = vmatpush1.bf16.xpose.msra.mxu0 0
  %1003 = vmatprep.subr.bf16.mxu0 0
  %1004 = vmatpush1.bf16.xpose.msra.mxu0 0
  %1005 = vmatprep.mubr.bf16.mxu0 0
  %1006 = vmatmul.mubr.bf16.gmra.mrb[0].mxu0 %v971
  %v1007 = vpop.f32.mrb[0].mxu0
  %v1008 = vadd.f32 0.0, %v1007
  %v1009 = vpop.f32.mrb[0].mxu0
  %v1010 = vpop.f32.mrb[0].mxu0
  %v1011 = vpop.f32.mrb[0].mxu0
  %1012 = vdwg.mxu0
  %v1014 = vsel %vm763, %v923, 0
  %1016 = vmatprep.subr.bf16.mxu0 0
  %1017 = vmatpush1.bf16.xpose.msra.mxu0 %v1014
  %1018 = vmatprep.subr.bf16.mxu0 0
  %1019 = vmatpush1.bf16.xpose.msra.mxu0 0
  %1020 = vmatprep.subr.bf16.mxu0 0
  %1021 = vmatpush1.bf16.xpose.msra.mxu0 0
  %1022 = vmatprep.subr.bf16.mxu0 0
  %1023 = vmatpush1.bf16.xpose.msra.mxu0 0
  %1024 = vmatprep.subr.bf16.mxu0 0
  %1025 = vmatpush1.bf16.xpose.msra.mxu0 0
  %1026 = vmatprep.subr.bf16.mxu0 0
  %1027 = vmatpush1.bf16.xpose.msra.mxu0 0
  %1028 = vmatprep.subr.bf16.mxu0 0
  %1029 = vmatpush1.bf16.xpose.msra.mxu0 0
  %1030 = vmatprep.subr.bf16.mxu0 0
  %1031 = vmatpush1.bf16.xpose.msra.mxu0 0
  %1032 = vmatprep.subr.bf16.mxu0 0
  %1033 = vmatpush1.bf16.xpose.msra.mxu0 0
  %1034 = vmatprep.subr.bf16.mxu0 0
  %1035 = vmatpush1.bf16.xpose.msra.mxu0 0
  %1036 = vmatprep.subr.bf16.mxu0 0
  %1037 = vmatpush1.bf16.xpose.msra.mxu0 0
  %1038 = vmatprep.subr.bf16.mxu0 0
  %1039 = vmatpush1.bf16.xpose.msra.mxu0 0
  %1040 = vmatprep.subr.bf16.mxu0 0
  %1041 = vmatpush1.bf16.xpose.msra.mxu0 0
  %1042 = vmatprep.subr.bf16.mxu0 0
  %1043 = vmatpush1.bf16.xpose.msra.mxu0 0
  %1044 = vmatprep.subr.bf16.mxu0 0
  %1045 = vmatpush1.bf16.xpose.msra.mxu0 0
  %1046 = vmatprep.subr.bf16.mxu0 0
  %1047 = vmatpush1.bf16.xpose.msra.mxu0 0
  %1048 = vmatprep.mubr.bf16.mxu0 0
  %1049 = vmatmul.mubr.bf16.gmra.mrb[0].mxu0 %v1014
  %v1050 = vpop.f32.mrb[0].mxu0
  %v1051 = vadd.f32 0.0, %v1050
  %v1052 = vpop.f32.mrb[0].mxu0
  %v1053 = vpop.f32.mrb[0].mxu0
  %v1054 = vpop.f32.mrb[0].mxu0
  %1055 = vdwg.mxu0
  %v1057 = vsel %vm763, %v924, 0
  %1059 = vmatprep.subr.bf16.mxu0 0
  %1060 = vmatpush1.bf16.xpose.msra.mxu0 %v1057
  %1061 = vmatprep.subr.bf16.mxu0 0
  %1062 = vmatpush1.bf16.xpose.msra.mxu0 0
  %1063 = vmatprep.subr.bf16.mxu0 0
  %1064 = vmatpush1.bf16.xpose.msra.mxu0 0
  %1065 = vmatprep.subr.bf16.mxu0 0
  %1066 = vmatpush1.bf16.xpose.msra.mxu0 0
  %1067 = vmatprep.subr.bf16.mxu0 0
  %1068 = vmatpush1.bf16.xpose.msra.mxu0 0
  %1069 = vmatprep.subr.bf16.mxu0 0
  %1070 = vmatpush1.bf16.xpose.msra.mxu0 0
  %1071 = vmatprep.subr.bf16.mxu0 0
  %1072 = vmatpush1.bf16.xpose.msra.mxu0 0
  %1073 = vmatprep.subr.bf16.mxu0 0
  %1074 = vmatpush1.bf16.xpose.msra.mxu0 0
  %1075 = vmatprep.subr.bf16.mxu0 0
  %1076 = vmatpush1.bf16.xpose.msra.mxu0 0
  %1077 = vmatprep.subr.bf16.mxu0 0
  %1078 = vmatpush1.bf16.xpose.msra.mxu0 0
  %1079 = vmatprep.subr.bf16.mxu0 0
  %1080 = vmatpush1.bf16.xpose.msra.mxu0 0
  %1081 = vmatprep.subr.bf16.mxu0 0
  %1082 = vmatpush1.bf16.xpose.msra.mxu0 0
  %1083 = vmatprep.subr.bf16.mxu0 0
  %1084 = vmatpush1.bf16.xpose.msra.mxu0 0
  %1085 = vmatprep.subr.bf16.mxu0 0
  %1086 = vmatpush1.bf16.xpose.msra.mxu0 0
  %1087 = vmatprep.subr.bf16.mxu0 0
  %1088 = vmatpush1.bf16.xpose.msra.mxu0 0
  %1089 = vmatprep.subr.bf16.mxu0 0
  %1090 = vmatpush1.bf16.xpose.msra.mxu0 0
  %1091 = vmatprep.mubr.bf16.mxu0 0
  %1092 = vmatmul.mubr.bf16.gmra.mrb[0].mxu0 %v1057
  %v1093 = vpop.f32.mrb[0].mxu0
  %v1094 = vadd.f32 0.0, %v1093
  %v1095 = vpop.f32.mrb[0].mxu0
  %v1096 = vpop.f32.mrb[0].mxu0
  %v1097 = vpop.f32.mrb[0].mxu0
  %1098 = vdwg.mxu0
  %v1100 = vsel %vm763, %v925, 0
  %1102 = vmatprep.subr.bf16.mxu0 0
  %1103 = vmatpush1.bf16.xpose.msra.mxu0 %v1100
  %1104 = vmatprep.subr.bf16.mxu0 0
  %1105 = vmatpush1.bf16.xpose.msra.mxu0 0
  %1106 = vmatprep.subr.bf16.mxu0 0
  %1107 = vmatpush1.bf16.xpose.msra.mxu0 0
  %1108 = vmatprep.subr.bf16.mxu0 0
  %1109 = vmatpush1.bf16.xpose.msra.mxu0 0
  %1110 = vmatprep.subr.bf16.mxu0 0
  %1111 = vmatpush1.bf16.xpose.msra.mxu0 0
  %1112 = vmatprep.subr.bf16.mxu0 0
  %1113 = vmatpush1.bf16.xpose.msra.mxu0 0
  %1114 = vmatprep.subr.bf16.mxu0 0
  %1115 = vmatpush1.bf16.xpose.msra.mxu0 0
  %1116 = vmatprep.subr.bf16.mxu0 0
  %1117 = vmatpush1.bf16.xpose.msra.mxu0 0
  %1118 = vmatprep.subr.bf16.mxu0 0
  %1119 = vmatpush1.bf16.xpose.msra.mxu0 0
  %1120 = vmatprep.subr.bf16.mxu0 0
  %1121 = vmatpush1.bf16.xpose.msra.mxu0 0
  %1122 = vmatprep.subr.bf16.mxu0 0
  %1123 = vmatpush1.bf16.xpose.msra.mxu0 0
  %1124 = vmatprep.subr.bf16.mxu0 0
  %1125 = vmatpush1.bf16.xpose.msra.mxu0 0
  %1126 = vmatprep.subr.bf16.mxu0 0
  %1127 = vmatpush1.bf16.xpose.msra.mxu0 0
  %1128 = vmatprep.subr.bf16.mxu0 0
  %1129 = vmatpush1.bf16.xpose.msra.mxu0 0
  %1130 = vmatprep.subr.bf16.mxu0 0
  %1131 = vmatpush1.bf16.xpose.msra.mxu0 0
  %1132 = vmatprep.subr.bf16.mxu0 0
  %1133 = vmatpush1.bf16.xpose.msra.mxu0 0
  %1134 = vmatprep.mubr.bf16.mxu0 0
  %1135 = vmatmul.mubr.bf16.gmra.mrb[0].mxu0 %v1100
  %v1136 = vpop.f32.mrb[0].mxu0
  %v1137 = vadd.f32 0.0, %v1136
  %v1138 = vpop.f32.mrb[0].mxu0
  %v1139 = vpop.f32.mrb[0].mxu0
  %v1140 = vpop.f32.mrb[0].mxu0
  %1141 = vdwg.mxu0
  %v1143 = vsel %vm763, %v926, 0
  %1145 = vmatprep.subr.bf16.mxu0 0
  %1146 = vmatpush1.bf16.xpose.msra.mxu0 %v1143
  %1147 = vmatprep.subr.bf16.mxu0 0
  %1148 = vmatpush1.bf16.xpose.msra.mxu0 0
  %1149 = vmatprep.subr.bf16.mxu0 0
  %1150 = vmatpush1.bf16.xpose.msra.mxu0 0
  %1151 = vmatprep.subr.bf16.mxu0 0
  %1152 = vmatpush1.bf16.xpose.msra.mxu0 0
  %1153 = vmatprep.subr.bf16.mxu0 0
  %1154 = vmatpush1.bf16.xpose.msra.mxu0 0
  %1155 = vmatprep.subr.bf16.mxu0 0
  %1156 = vmatpush1.bf16.xpose.msra.mxu0 0
  %1157 = vmatprep.subr.bf16.mxu0 0
  %1158 = vmatpush1.bf16.xpose.msra.mxu0 0
  %1159 = vmatprep.subr.bf16.mxu0 0
  %1160 = vmatpush1.bf16.xpose.msra.mxu0 0
  %1161 = vmatprep.subr.bf16.mxu0 0
  %1162 = vmatpush1.bf16.xpose.msra.mxu0 0
  %1163 = vmatprep.subr.bf16.mxu0 0
  %1164 = vmatpush1.bf16.xpose.msra.mxu0 0
  %1165 = vmatprep.subr.bf16.mxu0 0
  %1166 = vmatpush1.bf16.xpose.msra.mxu0 0
  %1167 = vmatprep.subr.bf16.mxu0 0
  %1168 = vmatpush1.bf16.xpose.msra.mxu0 0
  %1169 = vmatprep.subr.bf16.mxu0 0
  %1170 = vmatpush1.bf16.xpose.msra.mxu0 0
  %1171 = vmatprep.subr.bf16.mxu0 0
  %1172 = vmatpush1.bf16.xpose.msra.mxu0 0
  %1173 = vmatprep.subr.bf16.mxu0 0
  %1174 = vmatpush1.bf16.xpose.msra.mxu0 0
  %1175 = vmatprep.subr.bf16.mxu0 0
  %1176 = vmatpush1.bf16.xpose.msra.mxu0 0
  %1177 = vmatprep.mubr.bf16.mxu0 0
  %1178 = vmatmul.mubr.bf16.gmra.mrb[0].mxu0 %v1143
  %v1179 = vpop.f32.mrb[0].mxu0
  %v1180 = vadd.f32 0.0, %v1179
  %v1181 = vpop.f32.mrb[0].mxu0
  %v1182 = vpop.f32.mrb[0].mxu0
  %v1183 = vpop.f32.mrb[0].mxu0
  %1184 = vdwg.mxu0
  %1186 = vrot.lane.b32.xlu0 %v921, 96
  %v1187 = vpop.permute.xlu0 %1186
  %v1189 = vsel %vm763, %v1187, 0
  %1191 = vmatprep.subr.bf16.mxu0 0
  %1192 = vmatpush1.bf16.xpose.msra.mxu0 %v1189
  %1193 = vmatprep.subr.bf16.mxu0 0
  %1194 = vmatpush1.bf16.xpose.msra.mxu0 0
  %1195 = vmatprep.subr.bf16.mxu0 0
  %1196 = vmatpush1.bf16.xpose.msra.mxu0 0
  %1197 = vmatprep.subr.bf16.mxu0 0
  %1198 = vmatpush1.bf16.xpose.msra.mxu0 0
  %1199 = vmatprep.subr.bf16.mxu0 0
  %1200 = vmatpush1.bf16.xpose.msra.mxu0 0
  %1201 = vmatprep.subr.bf16.mxu0 0
  %1202 = vmatpush1.bf16.xpose.msra.mxu0 0
  %1203 = vmatprep.subr.bf16.mxu0 0
  %1204 = vmatpush1.bf16.xpose.msra.mxu0 0
  %1205 = vmatprep.subr.bf16.mxu0 0
  %1206 = vmatpush1.bf16.xpose.msra.mxu0 0
  %1207 = vmatprep.subr.bf16.mxu0 0
  %1208 = vmatpush1.bf16.xpose.msra.mxu0 0
  %1209 = vmatprep.subr.bf16.mxu0 0
  %1210 = vmatpush1.bf16.xpose.msra.mxu0 0
  %1211 = vmatprep.subr.bf16.mxu0 0
  %1212 = vmatpush1.bf16.xpose.msra.mxu0 0
  %1213 = vmatprep.subr.bf16.mxu0 0
  %1214 = vmatpush1.bf16.xpose.msra.mxu0 0
  %1215 = vmatprep.subr.bf16.mxu0 0
  %1216 = vmatpush1.bf16.xpose.msra.mxu0 0
  %1217 = vmatprep.subr.bf16.mxu0 0
  %1218 = vmatpush1.bf16.xpose.msra.mxu0 0
  %1219 = vmatprep.subr.bf16.mxu0 0
  %1220 = vmatpush1.bf16.xpose.msra.mxu0 0
  %1221 = vmatprep.subr.bf16.mxu0 0
  %1222 = vmatpush1.bf16.xpose.msra.mxu0 0
  %1223 = vmatprep.mubr.bf16.mxu0 0
  %1224 = vmatmul.mubr.bf16.gmra.mrb[0].mxu0 %v1189
  %v1225 = vpop.f32.mrb[0].mxu0
  %v1226 = vadd.f32 0.0, %v1225
  %v1227 = vpop.f32.mrb[0].mxu0
  %v1228 = vpop.f32.mrb[0].mxu0
  %v1229 = vpop.f32.mrb[0].mxu0
  %1230 = vdwg.mxu0
  %1232 = vrot.lane.b32.xlu0 %v922, 96
  %v1233 = vpop.permute.xlu0 %1232
  %v1235 = vsel %vm763, %v1233, 0
  %1237 = vmatprep.subr.bf16.mxu0 0
  %1238 = vmatpush1.bf16.xpose.msra.mxu0 %v1235
  %1239 = vmatprep.subr.bf16.mxu0 0
  %1240 = vmatpush1.bf16.xpose.msra.mxu0 0
  %1241 = vmatprep.subr.bf16.mxu0 0
  %1242 = vmatpush1.bf16.xpose.msra.mxu0 0
  %1243 = vmatprep.subr.bf16.mxu0 0
  %1244 = vmatpush1.bf16.xpose.msra.mxu0 0
  %1245 = vmatprep.subr.bf16.mxu0 0
  %1246 = vmatpush1.bf16.xpose.msra.mxu0 0
  %1247 = vmatprep.subr.bf16.mxu0 0
  %1248 = vmatpush1.bf16.xpose.msra.mxu0 0
  %1249 = vmatprep.subr.bf16.mxu0 0
  %1250 = vmatpush1.bf16.xpose.msra.mxu0 0
  %1251 = vmatprep.subr.bf16.mxu0 0
  %1252 = vmatpush1.bf16.xpose.msra.mxu0 0
  %1253 = vmatprep.subr.bf16.mxu0 0
  %1254 = vmatpush1.bf16.xpose.msra.mxu0 0
  %1255 = vmatprep.subr.bf16.mxu0 0
  %1256 = vmatpush1.bf16.xpose.msra.mxu0 0
  %1257 = vmatprep.subr.bf16.mxu0 0
  %1258 = vmatpush1.bf16.xpose.msra.mxu0 0
  %1259 = vmatprep.subr.bf16.mxu0 0
  %1260 = vmatpush1.bf16.xpose.msra.mxu0 0
  %1261 = vmatprep.subr.bf16.mxu0 0
  %1262 = vmatpush1.bf16.xpose.msra.mxu0 0
  %1263 = vmatprep.subr.bf16.mxu0 0
  %1264 = vmatpush1.bf16.xpose.msra.mxu0 0
  %1265 = vmatprep.subr.bf16.mxu0 0
  %1266 = vmatpush1.bf16.xpose.msra.mxu0 0
  %1267 = vmatprep.subr.bf16.mxu0 0
  %1268 = vmatpush1.bf16.xpose.msra.mxu0 0
  %1269 = vmatprep.mubr.bf16.mxu0 0
  %1270 = vmatmul.mubr.bf16.gmra.mrb[0].mxu0 %v1235
  %v1271 = vpop.f32.mrb[0].mxu0
  %v1272 = vadd.f32 0.0, %v1271
  %v1273 = vpop.f32.mrb[0].mxu0
  %v1274 = vpop.f32.mrb[0].mxu0
  %v1275 = vpop.f32.mrb[0].mxu0
  %1276 = vdwg.mxu0
  %1278 = vrot.lane.b32.xlu0 %v923, 96
  %v1279 = vpop.permute.xlu0 %1278
  %v1281 = vsel %vm763, %v1279, 0
  %1283 = vmatprep.subr.bf16.mxu0 0
  %1284 = vmatpush1.bf16.xpose.msra.mxu0 %v1281
  %1285 = vmatprep.subr.bf16.mxu0 0
  %1286 = vmatpush1.bf16.xpose.msra.mxu0 0
  %1287 = vmatprep.subr.bf16.mxu0 0
  %1288 = vmatpush1.bf16.xpose.msra.mxu0 0
  %1289 = vmatprep.subr.bf16.mxu0 0
  %1290 = vmatpush1.bf16.xpose.msra.mxu0 0
  %1291 = vmatprep.subr.bf16.mxu0 0
  %1292 = vmatpush1.bf16.xpose.msra.mxu0 0
  %1293 = vmatprep.subr.bf16.mxu0 0
  %1294 = vmatpush1.bf16.xpose.msra.mxu0 0
  %1295 = vmatprep.subr.bf16.mxu0 0
  %1296 = vmatpush1.bf16.xpose.msra.mxu0 0
  %1297 = vmatprep.subr.bf16.mxu0 0
  %1298 = vmatpush1.bf16.xpose.msra.mxu0 0
  %1299 = vmatprep.subr.bf16.mxu0 0
  %1300 = vmatpush1.bf16.xpose.msra.mxu0 0
  %1301 = vmatprep.subr.bf16.mxu0 0
  %1302 = vmatpush1.bf16.xpose.msra.mxu0 0
  %1303 = vmatprep.subr.bf16.mxu0 0
  %1304 = vmatpush1.bf16.xpose.msra.mxu0 0
  %1305 = vmatprep.subr.bf16.mxu0 0
  %1306 = vmatpush1.bf16.xpose.msra.mxu0 0
  %1307 = vmatprep.subr.bf16.mxu0 0
  %1308 = vmatpush1.bf16.xpose.msra.mxu0 0
  %1309 = vmatprep.subr.bf16.mxu0 0
  %1310 = vmatpush1.bf16.xpose.msra.mxu0 0
  %1311 = vmatprep.subr.bf16.mxu0 0
  %1312 = vmatpush1.bf16.xpose.msra.mxu0 0
  %1313 = vmatprep.subr.bf16.mxu0 0
  %1314 = vmatpush1.bf16.xpose.msra.mxu0 0
  %1315 = vmatprep.mubr.bf16.mxu0 0
  %1316 = vmatmul.mubr.bf16.gmra.mrb[0].mxu0 %v1281
  %v1317 = vpop.f32.mrb[0].mxu0
  %v1318 = vadd.f32 0.0, %v1317
  %v1319 = vpop.f32.mrb[0].mxu0
  %v1320 = vpop.f32.mrb[0].mxu0
  %v1321 = vpop.f32.mrb[0].mxu0
  %1322 = vdwg.mxu0
  %1324 = vrot.lane.b32.xlu0 %v924, 96
  %v1325 = vpop.permute.xlu0 %1324
  %v1327 = vsel %vm763, %v1325, 0
  %1329 = vmatprep.subr.bf16.mxu0 0
  %1330 = vmatpush1.bf16.xpose.msra.mxu0 %v1327
  %1331 = vmatprep.subr.bf16.mxu0 0
  %1332 = vmatpush1.bf16.xpose.msra.mxu0 0
  %1333 = vmatprep.subr.bf16.mxu0 0
  %1334 = vmatpush1.bf16.xpose.msra.mxu0 0
  %1335 = vmatprep.subr.bf16.mxu0 0
  %1336 = vmatpush1.bf16.xpose.msra.mxu0 0
  %1337 = vmatprep.subr.bf16.mxu0 0
  %1338 = vmatpush1.bf16.xpose.msra.mxu0 0
  %1339 = vmatprep.subr.bf16.mxu0 0
  %1340 = vmatpush1.bf16.xpose.msra.mxu0 0
  %1341 = vmatprep.subr.bf16.mxu0 0
  %1342 = vmatpush1.bf16.xpose.msra.mxu0 0
  %1343 = vmatprep.subr.bf16.mxu0 0
  %1344 = vmatpush1.bf16.xpose.msra.mxu0 0
  %1345 = vmatprep.subr.bf16.mxu0 0
  %1346 = vmatpush1.bf16.xpose.msra.mxu0 0
  %1347 = vmatprep.subr.bf16.mxu0 0
  %1348 = vmatpush1.bf16.xpose.msra.mxu0 0
  %1349 = vmatprep.subr.bf16.mxu0 0
  %1350 = vmatpush1.bf16.xpose.msra.mxu0 0
  %1351 = vmatprep.subr.bf16.mxu0 0
  %1352 = vmatpush1.bf16.xpose.msra.mxu0 0
  %1353 = vmatprep.subr.bf16.mxu0 0
  %1354 = vmatpush1.bf16.xpose.msra.mxu0 0
  %1355 = vmatprep.subr.bf16.mxu0 0
  %1356 = vmatpush1.bf16.xpose.msra.mxu0 0
  %1357 = vmatprep.subr.bf16.mxu0 0
  %1358 = vmatpush1.bf16.xpose.msra.mxu0 0
  %1359 = vmatprep.subr.bf16.mxu0 0
  %1360 = vmatpush1.bf16.xpose.msra.mxu0 0
  %1361 = vmatprep.mubr.bf16.mxu0 0
  %1362 = vmatmul.mubr.bf16.gmra.mrb[0].mxu0 %v1327
  %v1363 = vpop.f32.mrb[0].mxu0
  %v1364 = vadd.f32 0.0, %v1363
  %v1365 = vpop.f32.mrb[0].mxu0
  %v1366 = vpop.f32.mrb[0].mxu0
  %v1367 = vpop.f32.mrb[0].mxu0
  %1368 = vdwg.mxu0
  %1370 = vrot.lane.b32.xlu0 %v925, 96
  %v1371 = vpop.permute.xlu0 %1370
  %v1373 = vsel %vm763, %v1371, 0
  %1375 = vmatprep.subr.bf16.mxu0 0
  %1376 = vmatpush1.bf16.xpose.msra.mxu0 %v1373
  %1377 = vmatprep.subr.bf16.mxu0 0
  %1378 = vmatpush1.bf16.xpose.msra.mxu0 0
  %1379 = vmatprep.subr.bf16.mxu0 0
  %1380 = vmatpush1.bf16.xpose.msra.mxu0 0
  %1381 = vmatprep.subr.bf16.mxu0 0
  %1382 = vmatpush1.bf16.xpose.msra.mxu0 0
  %1383 = vmatprep.subr.bf16.mxu0 0
  %1384 = vmatpush1.bf16.xpose.msra.mxu0 0
  %1385 = vmatprep.subr.bf16.mxu0 0
  %1386 = vmatpush1.bf16.xpose.msra.mxu0 0
  %1387 = vmatprep.subr.bf16.mxu0 0
  %1388 = vmatpush1.bf16.xpose.msra.mxu0 0
  %1389 = vmatprep.subr.bf16.mxu0 0
  %1390 = vmatpush1.bf16.xpose.msra.mxu0 0
  %1391 = vmatprep.subr.bf16.mxu0 0
  %1392 = vmatpush1.bf16.xpose.msra.mxu0 0
  %1393 = vmatprep.subr.bf16.mxu0 0
  %1394 = vmatpush1.bf16.xpose.msra.mxu0 0
  %1395 = vmatprep.subr.bf16.mxu0 0
  %1396 = vmatpush1.bf16.xpose.msra.mxu0 0
  %1397 = vmatprep.subr.bf16.mxu0 0
  %1398 = vmatpush1.bf16.xpose.msra.mxu0 0
  %1399 = vmatprep.subr.bf16.mxu0 0
  %1400 = vmatpush1.bf16.xpose.msra.mxu0 0
  %1401 = vmatprep.subr.bf16.mxu0 0
  %1402 = vmatpush1.bf16.xpose.msra.mxu0 0
  %1403 = vmatprep.subr.bf16.mxu0 0
  %1404 = vmatpush1.bf16.xpose.msra.mxu0 0
  %1405 = vmatprep.subr.bf16.mxu0 0
  %1406 = vmatpush1.bf16.xpose.msra.mxu0 0
  %1407 = vmatprep.mubr.bf16.mxu0 0
  %1408 = vmatmul.mubr.bf16.gmra.mrb[0].mxu0 %v1373
  %v1409 = vpop.f32.mrb[0].mxu0
  %v1410 = vadd.f32 0.0, %v1409
  %v1411 = vpop.f32.mrb[0].mxu0
  %v1412 = vpop.f32.mrb[0].mxu0
  %v1413 = vpop.f32.mrb[0].mxu0
  %1414 = vdwg.mxu0
  %1416 = vrot.lane.b32.xlu0 %v926, 96
  %v1417 = vpop.permute.xlu0 %1416
  %v1419 = vsel %vm763, %v1417, 0
  %1421 = vmatprep.subr.bf16.mxu0 0
  %1422 = vmatpush1.bf16.xpose.msra.mxu0 %v1419
  %1423 = vmatprep.subr.bf16.mxu0 0
  %1424 = vmatpush1.bf16.xpose.msra.mxu0 0
  %1425 = vmatprep.subr.bf16.mxu0 0
  %1426 = vmatpush1.bf16.xpose.msra.mxu0 0
  %1427 = vmatprep.subr.bf16.mxu0 0
  %1428 = vmatpush1.bf16.xpose.msra.mxu0 0
  %1429 = vmatprep.subr.bf16.mxu0 0
  %1430 = vmatpush1.bf16.xpose.msra.mxu0 0
  %1431 = vmatprep.subr.bf16.mxu0 0
  %1432 = vmatpush1.bf16.xpose.msra.mxu0 0
  %1433 = vmatprep.subr.bf16.mxu0 0
  %1434 = vmatpush1.bf16.xpose.msra.mxu0 0
  %1435 = vmatprep.subr.bf16.mxu0 0
  %1436 = vmatpush1.bf16.xpose.msra.mxu0 0
  %1437 = vmatprep.subr.bf16.mxu0 0
  %1438 = vmatpush1.bf16.xpose.msra.mxu0 0
  %1439 = vmatprep.subr.bf16.mxu0 0
  %1440 = vmatpush1.bf16.xpose.msra.mxu0 0
  %1441 = vmatprep.subr.bf16.mxu0 0
  %1442 = vmatpush1.bf16.xpose.msra.mxu0 0
  %1443 = vmatprep.subr.bf16.mxu0 0
  %1444 = vmatpush1.bf16.xpose.msra.mxu0 0
  %1445 = vmatprep.subr.bf16.mxu0 0
  %1446 = vmatpush1.bf16.xpose.msra.mxu0 0
  %1447 = vmatprep.subr.bf16.mxu0 0
  %1448 = vmatpush1.bf16.xpose.msra.mxu0 0
  %1449 = vmatprep.subr.bf16.mxu0 0
  %1450 = vmatpush1.bf16.xpose.msra.mxu0 0
  %1451 = vmatprep.subr.bf16.mxu0 0
  %1452 = vmatpush1.bf16.xpose.msra.mxu0 0
  %1453 = vmatprep.mubr.bf16.mxu0 0
  %1454 = vmatmul.mubr.bf16.gmra.mrb[0].mxu0 %v1419
  %v1455 = vpop.f32.mrb[0].mxu0
  %v1456 = vadd.f32 0.0, %v1455
  %v1457 = vpop.f32.mrb[0].mxu0
  %v1458 = vpop.f32.mrb[0].mxu0
  %v1459 = vpop.f32.mrb[0].mxu0
  %1460 = vdwg.mxu0
  %1461 = vrot.lane.b32.xlu0 %v921, 64
  %v1462 = vpop.permute.xlu0 %1461
  %v1464 = vsel %vm763, %v1462, 0
  %1466 = vmatprep.subr.bf16.mxu0 0
  %1467 = vmatpush1.bf16.xpose.msra.mxu0 %v1464
  %1468 = vmatprep.subr.bf16.mxu0 0
  %1469 = vmatpush1.bf16.xpose.msra.mxu0 0
  %1470 = vmatprep.subr.bf16.mxu0 0
  %1471 = vmatpush1.bf16.xpose.msra.mxu0 0
  %1472 = vmatprep.subr.bf16.mxu0 0
  %1473 = vmatpush1.bf16.xpose.msra.mxu0 0
  %1474 = vmatprep.subr.bf16.mxu0 0
  %1475 = vmatpush1.bf16.xpose.msra.mxu0 0
  %1476 = vmatprep.subr.bf16.mxu0 0
  %1477 = vmatpush1.bf16.xpose.msra.mxu0 0
  %1478 = vmatprep.subr.bf16.mxu0 0
  %1479 = vmatpush1.bf16.xpose.msra.mxu0 0
  %1480 = vmatprep.subr.bf16.mxu0 0
  %1481 = vmatpush1.bf16.xpose.msra.mxu0 0
  %1482 = vmatprep.subr.bf16.mxu0 0
  %1483 = vmatpush1.bf16.xpose.msra.mxu0 0
  %1484 = vmatprep.subr.bf16.mxu0 0
  %1485 = vmatpush1.bf16.xpose.msra.mxu0 0
  %1486 = vmatprep.subr.bf16.mxu0 0
  %1487 = vmatpush1.bf16.xpose.msra.mxu0 0
  %1488 = vmatprep.subr.bf16.mxu0 0
  %1489 = vmatpush1.bf16.xpose.msra.mxu0 0
  %1490 = vmatprep.subr.bf16.mxu0 0
  %1491 = vmatpush1.bf16.xpose.msra.mxu0 0
  %1492 = vmatprep.subr.bf16.mxu0 0
  %1493 = vmatpush1.bf16.xpose.msra.mxu0 0
  %1494 = vmatprep.subr.bf16.mxu0 0
  %1495 = vmatpush1.bf16.xpose.msra.mxu0 0
  %1496 = vmatprep.subr.bf16.mxu0 0
  %1497 = vmatpush1.bf16.xpose.msra.mxu0 0
  %1498 = vmatprep.mubr.bf16.mxu0 0
  %1499 = vmatmul.mubr.bf16.gmra.mrb[0].mxu0 %v1464
  %v1500 = vpop.f32.mrb[0].mxu0
  %v1501 = vadd.f32 0.0, %v1500
  %v1502 = vpop.f32.mrb[0].mxu0
  %v1503 = vpop.f32.mrb[0].mxu0
  %v1504 = vpop.f32.mrb[0].mxu0
  %1505 = vdwg.mxu0
  %1506 = vrot.lane.b32.xlu0 %v922, 64
  %v1507 = vpop.permute.xlu0 %1506
  %v1509 = vsel %vm763, %v1507, 0
  %1511 = vmatprep.subr.bf16.mxu0 0
  %1512 = vmatpush1.bf16.xpose.msra.mxu0 %v1509
  %1513 = vmatprep.subr.bf16.mxu0 0
  %1514 = vmatpush1.bf16.xpose.msra.mxu0 0
  %1515 = vmatprep.subr.bf16.mxu0 0
  %1516 = vmatpush1.bf16.xpose.msra.mxu0 0
  %1517 = vmatprep.subr.bf16.mxu0 0
  %1518 = vmatpush1.bf16.xpose.msra.mxu0 0
  %1519 = vmatprep.subr.bf16.mxu0 0
  %1520 = vmatpush1.bf16.xpose.msra.mxu0 0
  %1521 = vmatprep.subr.bf16.mxu0 0
  %1522 = vmatpush1.bf16.xpose.msra.mxu0 0
  %1523 = vmatprep.subr.bf16.mxu0 0
  %1524 = vmatpush1.bf16.xpose.msra.mxu0 0
  %1525 = vmatprep.subr.bf16.mxu0 0
  %1526 = vmatpush1.bf16.xpose.msra.mxu0 0
  %1527 = vmatprep.subr.bf16.mxu0 0
  %1528 = vmatpush1.bf16.xpose.msra.mxu0 0
  %1529 = vmatprep.subr.bf16.mxu0 0
  %1530 = vmatpush1.bf16.xpose.msra.mxu0 0
  %1531 = vmatprep.subr.bf16.mxu0 0
  %1532 = vmatpush1.bf16.xpose.msra.mxu0 0
  %1533 = vmatprep.subr.bf16.mxu0 0
  %1534 = vmatpush1.bf16.xpose.msra.mxu0 0
  %1535 = vmatprep.subr.bf16.mxu0 0
  %1536 = vmatpush1.bf16.xpose.msra.mxu0 0
  %1537 = vmatprep.subr.bf16.mxu0 0
  %1538 = vmatpush1.bf16.xpose.msra.mxu0 0
  %1539 = vmatprep.subr.bf16.mxu0 0
  %1540 = vmatpush1.bf16.xpose.msra.mxu0 0
  %1541 = vmatprep.subr.bf16.mxu0 0
  %1542 = vmatpush1.bf16.xpose.msra.mxu0 0
  %1543 = vmatprep.mubr.bf16.mxu0 0
  %1544 = vmatmul.mubr.bf16.gmra.mrb[0].mxu0 %v1509
  %v1545 = vpop.f32.mrb[0].mxu0
  %v1546 = vadd.f32 0.0, %v1545
  %v1547 = vpop.f32.mrb[0].mxu0
  %v1548 = vpop.f32.mrb[0].mxu0
  %v1549 = vpop.f32.mrb[0].mxu0
  %1550 = vdwg.mxu0
  %1551 = vrot.lane.b32.xlu0 %v923, 64
  %v1552 = vpop.permute.xlu0 %1551
  %v1554 = vsel %vm763, %v1552, 0
  %1556 = vmatprep.subr.bf16.mxu0 0
  %1557 = vmatpush1.bf16.xpose.msra.mxu0 %v1554
  %1558 = vmatprep.subr.bf16.mxu0 0
  %1559 = vmatpush1.bf16.xpose.msra.mxu0 0
  %1560 = vmatprep.subr.bf16.mxu0 0
  %1561 = vmatpush1.bf16.xpose.msra.mxu0 0
  %1562 = vmatprep.subr.bf16.mxu0 0
  %1563 = vmatpush1.bf16.xpose.msra.mxu0 0
  %1564 = vmatprep.subr.bf16.mxu0 0
  %1565 = vmatpush1.bf16.xpose.msra.mxu0 0
  %1566 = vmatprep.subr.bf16.mxu0 0
  %1567 = vmatpush1.bf16.xpose.msra.mxu0 0
  %1568 = vmatprep.subr.bf16.mxu0 0
  %1569 = vmatpush1.bf16.xpose.msra.mxu0 0
  %1570 = vmatprep.subr.bf16.mxu0 0
  %1571 = vmatpush1.bf16.xpose.msra.mxu0 0
  %1572 = vmatprep.subr.bf16.mxu0 0
  %1573 = vmatpush1.bf16.xpose.msra.mxu0 0
  %1574 = vmatprep.subr.bf16.mxu0 0
  %1575 = vmatpush1.bf16.xpose.msra.mxu0 0
  %1576 = vmatprep.subr.bf16.mxu0 0
  %1577 = vmatpush1.bf16.xpose.msra.mxu0 0
  %1578 = vmatprep.subr.bf16.mxu0 0
  %1579 = vmatpush1.bf16.xpose.msra.mxu0 0
  %1580 = vmatprep.subr.bf16.mxu0 0
  %1581 = vmatpush1.bf16.xpose.msra.mxu0 0
  %1582 = vmatprep.subr.bf16.mxu0 0
  %1583 = vmatpush1.bf16.xpose.msra.mxu0 0
  %1584 = vmatprep.subr.bf16.mxu0 0
  %1585 = vmatpush1.bf16.xpose.msra.mxu0 0
  %1586 = vmatprep.subr.bf16.mxu0 0
  %1587 = vmatpush1.bf16.xpose.msra.mxu0 0
  %1588 = vmatprep.mubr.bf16.mxu0 0
  %1589 = vmatmul.mubr.bf16.gmra.mrb[0].mxu0 %v1554
  %v1590 = vpop.f32.mrb[0].mxu0
  %v1591 = vadd.f32 0.0, %v1590
  %v1592 = vpop.f32.mrb[0].mxu0
  %v1593 = vpop.f32.mrb[0].mxu0
  %v1594 = vpop.f32.mrb[0].mxu0
  %1595 = vdwg.mxu0
  %1596 = vrot.lane.b32.xlu0 %v924, 64
  %v1597 = vpop.permute.xlu0 %1596
  %v1599 = vsel %vm763, %v1597, 0
  %1601 = vmatprep.subr.bf16.mxu0 0
  %1602 = vmatpush1.bf16.xpose.msra.mxu0 %v1599
  %1603 = vmatprep.subr.bf16.mxu0 0
  %1604 = vmatpush1.bf16.xpose.msra.mxu0 0
  %1605 = vmatprep.subr.bf16.mxu0 0
  %1606 = vmatpush1.bf16.xpose.msra.mxu0 0
  %1607 = vmatprep.subr.bf16.mxu0 0
  %1608 = vmatpush1.bf16.xpose.msra.mxu0 0
  %1609 = vmatprep.subr.bf16.mxu0 0
  %1610 = vmatpush1.bf16.xpose.msra.mxu0 0
  %1611 = vmatprep.subr.bf16.mxu0 0
  %1612 = vmatpush1.bf16.xpose.msra.mxu0 0
  %1613 = vmatprep.subr.bf16.mxu0 0
  %1614 = vmatpush1.bf16.xpose.msra.mxu0 0
  %1615 = vmatprep.subr.bf16.mxu0 0
  %1616 = vmatpush1.bf16.xpose.msra.mxu0 0
  %1617 = vmatprep.subr.bf16.mxu0 0
  %1618 = vmatpush1.bf16.xpose.msra.mxu0 0
  %1619 = vmatprep.subr.bf16.mxu0 0
  %1620 = vmatpush1.bf16.xpose.msra.mxu0 0
  %1621 = vmatprep.subr.bf16.mxu0 0
  %1622 = vmatpush1.bf16.xpose.msra.mxu0 0
  %1623 = vmatprep.subr.bf16.mxu0 0
  %1624 = vmatpush1.bf16.xpose.msra.mxu0 0
  %1625 = vmatprep.subr.bf16.mxu0 0
  %1626 = vmatpush1.bf16.xpose.msra.mxu0 0
  %1627 = vmatprep.subr.bf16.mxu0 0
  %1628 = vmatpush1.bf16.xpose.msra.mxu0 0
  %1629 = vmatprep.subr.bf16.mxu0 0
  %1630 = vmatpush1.bf16.xpose.msra.mxu0 0
  %1631 = vmatprep.subr.bf16.mxu0 0
  %1632 = vmatpush1.bf16.xpose.msra.mxu0 0
  %1633 = vmatprep.mubr.bf16.mxu0 0
  %1634 = vmatmul.mubr.bf16.gmra.mrb[0].mxu0 %v1599
  %v1635 = vpop.f32.mrb[0].mxu0
  %v1636 = vadd.f32 0.0, %v1635
  %v1637 = vpop.f32.mrb[0].mxu0
  %v1638 = vpop.f32.mrb[0].mxu0
  %v1639 = vpop.f32.mrb[0].mxu0
  %1640 = vdwg.mxu0
  %1641 = vrot.lane.b32.xlu0 %v925, 64
  %v1642 = vpop.permute.xlu0 %1641
  %v1644 = vsel %vm763, %v1642, 0
  %1646 = vmatprep.subr.bf16.mxu0 0
  %1647 = vmatpush1.bf16.xpose.msra.mxu0 %v1644
  %1648 = vmatprep.subr.bf16.mxu0 0
  %1649 = vmatpush1.bf16.xpose.msra.mxu0 0
  %1650 = vmatprep.subr.bf16.mxu0 0
  %1651 = vmatpush1.bf16.xpose.msra.mxu0 0
  %1652 = vmatprep.subr.bf16.mxu0 0
  %1653 = vmatpush1.bf16.xpose.msra.mxu0 0
  %1654 = vmatprep.subr.bf16.mxu0 0
  %1655 = vmatpush1.bf16.xpose.msra.mxu0 0
  %1656 = vmatprep.subr.bf16.mxu0 0
  %1657 = vmatpush1.bf16.xpose.msra.mxu0 0
  %1658 = vmatprep.subr.bf16.mxu0 0
  %1659 = vmatpush1.bf16.xpose.msra.mxu0 0
  %1660 = vmatprep.subr.bf16.mxu0 0
  %1661 = vmatpush1.bf16.xpose.msra.mxu0 0
  %1662 = vmatprep.subr.bf16.mxu0 0
  %1663 = vmatpush1.bf16.xpose.msra.mxu0 0
  %1664 = vmatprep.subr.bf16.mxu0 0
  %1665 = vmatpush1.bf16.xpose.msra.mxu0 0
  %1666 = vmatprep.subr.bf16.mxu0 0
  %1667 = vmatpush1.bf16.xpose.msra.mxu0 0
  %1668 = vmatprep.subr.bf16.mxu0 0
  %1669 = vmatpush1.bf16.xpose.msra.mxu0 0
  %1670 = vmatprep.subr.bf16.mxu0 0
  %1671 = vmatpush1.bf16.xpose.msra.mxu0 0
  %1672 = vmatprep.subr.bf16.mxu0 0
  %1673 = vmatpush1.bf16.xpose.msra.mxu0 0
  %1674 = vmatprep.subr.bf16.mxu0 0
  %1675 = vmatpush1.bf16.xpose.msra.mxu0 0
  %1676 = vmatprep.subr.bf16.mxu0 0
  %1677 = vmatpush1.bf16.xpose.msra.mxu0 0
  %1678 = vmatprep.mubr.bf16.mxu0 0
  %1679 = vmatmul.mubr.bf16.gmra.mrb[0].mxu0 %v1644
  %v1680 = vpop.f32.mrb[0].mxu0
  %v1681 = vadd.f32 0.0, %v1680
  %v1682 = vpop.f32.mrb[0].mxu0
  %v1683 = vpop.f32.mrb[0].mxu0
  %v1684 = vpop.f32.mrb[0].mxu0
  %1685 = vdwg.mxu0
  %1686 = vrot.lane.b32.xlu0 %v926, 64
  %v1687 = vpop.permute.xlu0 %1686
  %v1689 = vsel %vm763, %v1687, 0
  %1691 = vmatprep.subr.bf16.mxu0 0
  %1692 = vmatpush1.bf16.xpose.msra.mxu0 %v1689
  %1693 = vmatprep.subr.bf16.mxu0 0
  %1694 = vmatpush1.bf16.xpose.msra.mxu0 0
  %1695 = vmatprep.subr.bf16.mxu0 0
  %1696 = vmatpush1.bf16.xpose.msra.mxu0 0
  %1697 = vmatprep.subr.bf16.mxu0 0
  %1698 = vmatpush1.bf16.xpose.msra.mxu0 0
  %1699 = vmatprep.subr.bf16.mxu0 0
  %1700 = vmatpush1.bf16.xpose.msra.mxu0 0
  %1701 = vmatprep.subr.bf16.mxu0 0
  %1702 = vmatpush1.bf16.xpose.msra.mxu0 0
  %1703 = vmatprep.subr.bf16.mxu0 0
  %1704 = vmatpush1.bf16.xpose.msra.mxu0 0
  %1705 = vmatprep.subr.bf16.mxu0 0
  %1706 = vmatpush1.bf16.xpose.msra.mxu0 0
  %1707 = vmatprep.subr.bf16.mxu0 0
  %1708 = vmatpush1.bf16.xpose.msra.mxu0 0
  %1709 = vmatprep.subr.bf16.mxu0 0
  %1710 = vmatpush1.bf16.xpose.msra.mxu0 0
  %1711 = vmatprep.subr.bf16.mxu0 0
  %1712 = vmatpush1.bf16.xpose.msra.mxu0 0
  %1713 = vmatprep.subr.bf16.mxu0 0
  %1714 = vmatpush1.bf16.xpose.msra.mxu0 0
  %1715 = vmatprep.subr.bf16.mxu0 0
  %1716 = vmatpush1.bf16.xpose.msra.mxu0 0
  %1717 = vmatprep.subr.bf16.mxu0 0
  %1718 = vmatpush1.bf16.xpose.msra.mxu0 0
  %1719 = vmatprep.subr.bf16.mxu0 0
  %1720 = vmatpush1.bf16.xpose.msra.mxu0 0
  %1721 = vmatprep.subr.bf16.mxu0 0
  %1722 = vmatpush1.bf16.xpose.msra.mxu0 0
  %1723 = vmatprep.mubr.bf16.mxu0 0
  %1724 = vmatmul.mubr.bf16.gmra.mrb[0].mxu0 %v1689
  %v1725 = vpop.f32.mrb[0].mxu0
  %v1726 = vadd.f32 0.0, %v1725
  %v1727 = vpop.f32.mrb[0].mxu0
  %v1728 = vpop.f32.mrb[0].mxu0
  %v1729 = vpop.f32.mrb[0].mxu0
  %1730 = vdwg.mxu0
  %1731 = vrot.lane.b32.xlu0 %v921, 32
  %v1732 = vpop.permute.xlu0 %1731
  %v1734 = vsel %vm763, %v1732, 0
  %1736 = vmatprep.subr.bf16.mxu0 0
  %1737 = vmatpush1.bf16.xpose.msra.mxu0 %v1734
  %1738 = vmatprep.subr.bf16.mxu0 0
  %1739 = vmatpush1.bf16.xpose.msra.mxu0 0
  %1740 = vmatprep.subr.bf16.mxu0 0
  %1741 = vmatpush1.bf16.xpose.msra.mxu0 0
  %1742 = vmatprep.subr.bf16.mxu0 0
  %1743 = vmatpush1.bf16.xpose.msra.mxu0 0
  %1744 = vmatprep.subr.bf16.mxu0 0
  %1745 = vmatpush1.bf16.xpose.msra.mxu0 0
  %1746 = vmatprep.subr.bf16.mxu0 0
  %1747 = vmatpush1.bf16.xpose.msra.mxu0 0
  %1748 = vmatprep.subr.bf16.mxu0 0
  %1749 = vmatpush1.bf16.xpose.msra.mxu0 0
  %1750 = vmatprep.subr.bf16.mxu0 0
  %1751 = vmatpush1.bf16.xpose.msra.mxu0 0
  %1752 = vmatprep.subr.bf16.mxu0 0
  %1753 = vmatpush1.bf16.xpose.msra.mxu0 0
  %1754 = vmatprep.subr.bf16.mxu0 0
  %1755 = vmatpush1.bf16.xpose.msra.mxu0 0
  %1756 = vmatprep.subr.bf16.mxu0 0
  %1757 = vmatpush1.bf16.xpose.msra.mxu0 0
  %1758 = vmatprep.subr.bf16.mxu0 0
  %1759 = vmatpush1.bf16.xpose.msra.mxu0 0
  %1760 = vmatprep.subr.bf16.mxu0 0
  %1761 = vmatpush1.bf16.xpose.msra.mxu0 0
  %1762 = vmatprep.subr.bf16.mxu0 0
  %1763 = vmatpush1.bf16.xpose.msra.mxu0 0
  %1764 = vmatprep.subr.bf16.mxu0 0
  %1765 = vmatpush1.bf16.xpose.msra.mxu0 0
  %1766 = vmatprep.subr.bf16.mxu0 0
  %1767 = vmatpush1.bf16.xpose.msra.mxu0 0
  %1768 = vmatprep.mubr.bf16.mxu0 0
  %1769 = vmatmul.mubr.bf16.gmra.mrb[0].mxu0 %v1734
  %v1770 = vpop.f32.mrb[0].mxu0
  %v1771 = vadd.f32 0.0, %v1770
  %v1772 = vpop.f32.mrb[0].mxu0
  %v1773 = vpop.f32.mrb[0].mxu0
  %v1774 = vpop.f32.mrb[0].mxu0
  %1775 = vdwg.mxu0
  %1776 = vrot.lane.b32.xlu0 %v922, 32
  %v1777 = vpop.permute.xlu0 %1776
  %v1779 = vsel %vm763, %v1777, 0
  %1781 = vmatprep.subr.bf16.mxu0 0
  %1782 = vmatpush1.bf16.xpose.msra.mxu0 %v1779
  %1783 = vmatprep.subr.bf16.mxu0 0
  %1784 = vmatpush1.bf16.xpose.msra.mxu0 0
  %1785 = vmatprep.subr.bf16.mxu0 0
  %1786 = vmatpush1.bf16.xpose.msra.mxu0 0
  %1787 = vmatprep.subr.bf16.mxu0 0
  %1788 = vmatpush1.bf16.xpose.msra.mxu0 0
  %1789 = vmatprep.subr.bf16.mxu0 0
  %1790 = vmatpush1.bf16.xpose.msra.mxu0 0
  %1791 = vmatprep.subr.bf16.mxu0 0
  %1792 = vmatpush1.bf16.xpose.msra.mxu0 0
  %1793 = vmatprep.subr.bf16.mxu0 0
  %1794 = vmatpush1.bf16.xpose.msra.mxu0 0
  %1795 = vmatprep.subr.bf16.mxu0 0
  %1796 = vmatpush1.bf16.xpose.msra.mxu0 0
  %1797 = vmatprep.subr.bf16.mxu0 0
  %1798 = vmatpush1.bf16.xpose.msra.mxu0 0
  %1799 = vmatprep.subr.bf16.mxu0 0
  %1800 = vmatpush1.bf16.xpose.msra.mxu0 0
  %1801 = vmatprep.subr.bf16.mxu0 0
  %1802 = vmatpush1.bf16.xpose.msra.mxu0 0
  %1803 = vmatprep.subr.bf16.mxu0 0
  %1804 = vmatpush1.bf16.xpose.msra.mxu0 0
  %1805 = vmatprep.subr.bf16.mxu0 0
  %1806 = vmatpush1.bf16.xpose.msra.mxu0 0
  %1807 = vmatprep.subr.bf16.mxu0 0
  %1808 = vmatpush1.bf16.xpose.msra.mxu0 0
  %1809 = vmatprep.subr.bf16.mxu0 0
  %1810 = vmatpush1.bf16.xpose.msra.mxu0 0
  %1811 = vmatprep.subr.bf16.mxu0 0
  %1812 = vmatpush1.bf16.xpose.msra.mxu0 0
  %1813 = vmatprep.mubr.bf16.mxu0 0
  %1814 = vmatmul.mubr.bf16.gmra.mrb[0].mxu0 %v1779
  %v1815 = vpop.f32.mrb[0].mxu0
  %v1816 = vadd.f32 0.0, %v1815
  %v1817 = vpop.f32.mrb[0].mxu0
  %v1818 = vpop.f32.mrb[0].mxu0
  %v1819 = vpop.f32.mrb[0].mxu0
  %1820 = vdwg.mxu0
  %1821 = vrot.lane.b32.xlu0 %v923, 32
  %v1822 = vpop.permute.xlu0 %1821
  %v1824 = vsel %vm763, %v1822, 0
  %1826 = vmatprep.subr.bf16.mxu0 0
  %1827 = vmatpush1.bf16.xpose.msra.mxu0 %v1824
  %1828 = vmatprep.subr.bf16.mxu0 0
  %1829 = vmatpush1.bf16.xpose.msra.mxu0 0
  %1830 = vmatprep.subr.bf16.mxu0 0
  %1831 = vmatpush1.bf16.xpose.msra.mxu0 0
  %1832 = vmatprep.subr.bf16.mxu0 0
  %1833 = vmatpush1.bf16.xpose.msra.mxu0 0
  %1834 = vmatprep.subr.bf16.mxu0 0
  %1835 = vmatpush1.bf16.xpose.msra.mxu0 0
  %1836 = vmatprep.subr.bf16.mxu0 0
  %1837 = vmatpush1.bf16.xpose.msra.mxu0 0
  %1838 = vmatprep.subr.bf16.mxu0 0
  %1839 = vmatpush1.bf16.xpose.msra.mxu0 0
  %1840 = vmatprep.subr.bf16.mxu0 0
  %1841 = vmatpush1.bf16.xpose.msra.mxu0 0
  %1842 = vmatprep.subr.bf16.mxu0 0
  %1843 = vmatpush1.bf16.xpose.msra.mxu0 0
  %1844 = vmatprep.subr.bf16.mxu0 0
  %1845 = vmatpush1.bf16.xpose.msra.mxu0 0
  %1846 = vmatprep.subr.bf16.mxu0 0
  %1847 = vmatpush1.bf16.xpose.msra.mxu0 0
  %1848 = vmatprep.subr.bf16.mxu0 0
  %1849 = vmatpush1.bf16.xpose.msra.mxu0 0
  %1850 = vmatprep.subr.bf16.mxu0 0
  %1851 = vmatpush1.bf16.xpose.msra.mxu0 0
  %1852 = vmatprep.subr.bf16.mxu0 0
  %1853 = vmatpush1.bf16.xpose.msra.mxu0 0
  %1854 = vmatprep.subr.bf16.mxu0 0
  %1855 = vmatpush1.bf16.xpose.msra.mxu0 0
  %1856 = vmatprep.subr.bf16.mxu0 0
  %1857 = vmatpush1.bf16.xpose.msra.mxu0 0
  %1858 = vmatprep.mubr.bf16.mxu0 0
  %1859 = vmatmul.mubr.bf16.gmra.mrb[0].mxu0 %v1824
  %v1860 = vpop.f32.mrb[0].mxu0
  %v1861 = vadd.f32 0.0, %v1860
  %v1862 = vpop.f32.mrb[0].mxu0
  %v1863 = vpop.f32.mrb[0].mxu0
  %v1864 = vpop.f32.mrb[0].mxu0
  %1865 = vdwg.mxu0
  %1866 = vrot.lane.b32.xlu0 %v924, 32
  %v1867 = vpop.permute.xlu0 %1866
  %v1869 = vsel %vm763, %v1867, 0
  %1871 = vmatprep.subr.bf16.mxu0 0
  %1872 = vmatpush1.bf16.xpose.msra.mxu0 %v1869
  %1873 = vmatprep.subr.bf16.mxu0 0
  %1874 = vmatpush1.bf16.xpose.msra.mxu0 0
  %1875 = vmatprep.subr.bf16.mxu0 0
  %1876 = vmatpush1.bf16.xpose.msra.mxu0 0
  %1877 = vmatprep.subr.bf16.mxu0 0
  %1878 = vmatpush1.bf16.xpose.msra.mxu0 0
  %1879 = vmatprep.subr.bf16.mxu0 0
  %1880 = vmatpush1.bf16.xpose.msra.mxu0 0
  %1881 = vmatprep.subr.bf16.mxu0 0
  %1882 = vmatpush1.bf16.xpose.msra.mxu0 0
  %1883 = vmatprep.subr.bf16.mxu0 0
  %1884 = vmatpush1.bf16.xpose.msra.mxu0 0
  %1885 = vmatprep.subr.bf16.mxu0 0
  %1886 = vmatpush1.bf16.xpose.msra.mxu0 0
  %1887 = vmatprep.subr.bf16.mxu0 0
  %1888 = vmatpush1.bf16.xpose.msra.mxu0 0
  %1889 = vmatprep.subr.bf16.mxu0 0
  %1890 = vmatpush1.bf16.xpose.msra.mxu0 0
  %1891 = vmatprep.subr.bf16.mxu0 0
  %1892 = vmatpush1.bf16.xpose.msra.mxu0 0
  %1893 = vmatprep.subr.bf16.mxu0 0
  %1894 = vmatpush1.bf16.xpose.msra.mxu0 0
  %1895 = vmatprep.subr.bf16.mxu0 0
  %1896 = vmatpush1.bf16.xpose.msra.mxu0 0
  %1897 = vmatprep.subr.bf16.mxu0 0
  %1898 = vmatpush1.bf16.xpose.msra.mxu0 0
  %1899 = vmatprep.subr.bf16.mxu0 0
  %1900 = vmatpush1.bf16.xpose.msra.mxu0 0
  %1901 = vmatprep.subr.bf16.mxu0 0
  %1902 = vmatpush1.bf16.xpose.msra.mxu0 0
  %1903 = vmatprep.mubr.bf16.mxu0 0
  %1904 = vmatmul.mubr.bf16.gmra.mrb[0].mxu0 %v1869
  %v1905 = vpop.f32.mrb[0].mxu0
  %v1906 = vadd.f32 0.0, %v1905
  %v1907 = vpop.f32.mrb[0].mxu0
  %v1908 = vpop.f32.mrb[0].mxu0
  %v1909 = vpop.f32.mrb[0].mxu0
  %1910 = vdwg.mxu0
  %1911 = vrot.lane.b32.xlu0 %v925, 32
  %v1912 = vpop.permute.xlu0 %1911
  %v1914 = vsel %vm763, %v1912, 0
  %1916 = vmatprep.subr.bf16.mxu0 0
  %1917 = vmatpush1.bf16.xpose.msra.mxu0 %v1914
  %1918 = vmatprep.subr.bf16.mxu0 0
  %1919 = vmatpush1.bf16.xpose.msra.mxu0 0
  %1920 = vmatprep.subr.bf16.mxu0 0
  %1921 = vmatpush1.bf16.xpose.msra.mxu0 0
  %1922 = vmatprep.subr.bf16.mxu0 0
  %1923 = vmatpush1.bf16.xpose.msra.mxu0 0
  %1924 = vmatprep.subr.bf16.mxu0 0
  %1925 = vmatpush1.bf16.xpose.msra.mxu0 0
  %1926 = vmatprep.subr.bf16.mxu0 0
  %1927 = vmatpush1.bf16.xpose.msra.mxu0 0
  %1928 = vmatprep.subr.bf16.mxu0 0
  %1929 = vmatpush1.bf16.xpose.msra.mxu0 0
  %1930 = vmatprep.subr.bf16.mxu0 0
  %1931 = vmatpush1.bf16.xpose.msra.mxu0 0
  %1932 = vmatprep.subr.bf16.mxu0 0
  %1933 = vmatpush1.bf16.xpose.msra.mxu0 0
  %1934 = vmatprep.subr.bf16.mxu0 0
  %1935 = vmatpush1.bf16.xpose.msra.mxu0 0
  %1936 = vmatprep.subr.bf16.mxu0 0
  %1937 = vmatpush1.bf16.xpose.msra.mxu0 0
  %1938 = vmatprep.subr.bf16.mxu0 0
  %1939 = vmatpush1.bf16.xpose.msra.mxu0 0
  %1940 = vmatprep.subr.bf16.mxu0 0
  %1941 = vmatpush1.bf16.xpose.msra.mxu0 0
  %1942 = vmatprep.subr.bf16.mxu0 0
  %1943 = vmatpush1.bf16.xpose.msra.mxu0 0
  %1944 = vmatprep.subr.bf16.mxu0 0
  %1945 = vmatpush1.bf16.xpose.msra.mxu0 0
  %1946 = vmatprep.subr.bf16.mxu0 0
  %1947 = vmatpush1.bf16.xpose.msra.mxu0 0
  %1948 = vmatprep.mubr.bf16.mxu0 0
  %1949 = vmatmul.mubr.bf16.gmra.mrb[0].mxu0 %v1914
  %v1950 = vpop.f32.mrb[0].mxu0
  %v1951 = vadd.f32 0.0, %v1950
  %v1952 = vpop.f32.mrb[0].mxu0
  %v1953 = vpop.f32.mrb[0].mxu0
  %v1954 = vpop.f32.mrb[0].mxu0
  %1955 = vdwg.mxu0
  %1956 = vrot.lane.b32.xlu0 %v926, 32
  %v1957 = vpop.permute.xlu0 %1956
  %v1959 = vsel %vm763, %v1957, 0
  %1961 = vmatprep.subr.bf16.mxu0 0
  %1962 = vmatpush1.bf16.xpose.msra.mxu0 %v1959
  %1963 = vmatprep.subr.bf16.mxu0 0
  %1964 = vmatpush1.bf16.xpose.msra.mxu0 0
  %1965 = vmatprep.subr.bf16.mxu0 0
  %1966 = vmatpush1.bf16.xpose.msra.mxu0 0
  %1967 = vmatprep.subr.bf16.mxu0 0
  %1968 = vmatpush1.bf16.xpose.msra.mxu0 0
  %1969 = vmatprep.subr.bf16.mxu0 0
  %1970 = vmatpush1.bf16.xpose.msra.mxu0 0
  %1971 = vmatprep.subr.bf16.mxu0 0
  %1972 = vmatpush1.bf16.xpose.msra.mxu0 0
  %1973 = vmatprep.subr.bf16.mxu0 0
  %1974 = vmatpush1.bf16.xpose.msra.mxu0 0
  %1975 = vmatprep.subr.bf16.mxu0 0
  %1976 = vmatpush1.bf16.xpose.msra.mxu0 0
  %1977 = vmatprep.subr.bf16.mxu0 0
  %1978 = vmatpush1.bf16.xpose.msra.mxu0 0
  %1979 = vmatprep.subr.bf16.mxu0 0
  %1980 = vmatpush1.bf16.xpose.msra.mxu0 0
  %1981 = vmatprep.subr.bf16.mxu0 0
  %1982 = vmatpush1.bf16.xpose.msra.mxu0 0
  %1983 = vmatprep.subr.bf16.mxu0 0
  %1984 = vmatpush1.bf16.xpose.msra.mxu0 0
  %1985 = vmatprep.subr.bf16.mxu0 0
  %1986 = vmatpush1.bf16.xpose.msra.mxu0 0
  %1987 = vmatprep.subr.bf16.mxu0 0
  %1988 = vmatpush1.bf16.xpose.msra.mxu0 0
  %1989 = vmatprep.subr.bf16.mxu0 0
  %1990 = vmatpush1.bf16.xpose.msra.mxu0 0
  %1991 = vmatprep.subr.bf16.mxu0 0
  %1992 = vmatpush1.bf16.xpose.msra.mxu0 0
  %1993 = vmatprep.mubr.bf16.mxu0 0
  %1994 = vmatmul.mubr.bf16.gmra.mrb[0].mxu0 %v1959
  %v1995 = vpop.f32.mrb[0].mxu0
  %v1996 = vadd.f32 0.0, %v1995
  %v1997 = vpop.f32.mrb[0].mxu0
  %v1998 = vpop.f32.mrb[0].mxu0
  %v1999 = vpop.f32.mrb[0].mxu0
  %2000 = vdwg.mxu0
  %2007 = vrot.lane.b32.xlu0 %v1226, 8
  %v2008 = vpop.permute.xlu0 %2007
  %2009 = vrot.lane.b32.xlu0 %v1272, 8
  %v2010 = vpop.permute.xlu0 %2009
  %2011 = vrot.lane.b32.xlu0 %v1318, 8
  %v2012 = vpop.permute.xlu0 %2011
  %2013 = vrot.lane.b32.xlu0 %v1364, 8
  %v2014 = vpop.permute.xlu0 %2013
  %2015 = vrot.lane.b32.xlu0 %v1410, 8
  %v2016 = vpop.permute.xlu0 %2015
  %2017 = vrot.lane.b32.xlu0 %v1456, 8
  %v2018 = vpop.permute.xlu0 %2017
  %2031 = vrot.lane.b32.xlu0 %v1501, 16
  %v2032 = vpop.permute.xlu0 %2031
  %2033 = vrot.lane.b32.xlu0 %v1546, 16
  %v2034 = vpop.permute.xlu0 %2033
  %2035 = vrot.lane.b32.xlu0 %v1591, 16
  %v2036 = vpop.permute.xlu0 %2035
  %2037 = vrot.lane.b32.xlu0 %v1636, 16
  %v2038 = vpop.permute.xlu0 %2037
  %2039 = vrot.lane.b32.xlu0 %v1681, 16
  %v2040 = vpop.permute.xlu0 %2039
  %2041 = vrot.lane.b32.xlu0 %v1726, 16
  %v2042 = vpop.permute.xlu0 %2041
  %2055 = vrot.lane.b32.xlu0 %v1771, 24
  %v2056 = vpop.permute.xlu0 %2055
  %2057 = vrot.lane.b32.xlu0 %v1816, 24
  %v2058 = vpop.permute.xlu0 %2057
  %2059 = vrot.lane.b32.xlu0 %v1861, 24
  %v2060 = vpop.permute.xlu0 %2059
  %2061 = vrot.lane.b32.xlu0 %v1906, 24
  %v2062 = vpop.permute.xlu0 %2061
  %2063 = vrot.lane.b32.xlu0 %v1951, 24
  %v2064 = vpop.permute.xlu0 %2063
  %2065 = vrot.lane.b32.xlu0 %v1996, 24
  %v2066 = vpop.permute.xlu0 %2065
  %vm2073 = vcmask 64512
  %v2074 = vsel %vm2073, %v965, %v2008
  %v2075 = vsel %vm2073, %v1008, %v2010
  %v2076 = vsel %vm2073, %v1051, %v2012
  %v2077 = vsel %vm2073, %v1094, %v2014
  %v2078 = vsel %vm2073, %v1137, %v2016
  %v2079 = vsel %vm2073, %v1180, %v2018
  %vm2080 = vcmask 130048
  %v2081 = vsel %vm2080, %v2074, %v2032
  %v2082 = vsel %vm2080, %v2075, %v2034
  %v2083 = vsel %vm2080, %v2076, %v2036
  %v2084 = vsel %vm2080, %v2077, %v2038
  %v2085 = vsel %vm2080, %v2078, %v2040
  %v2086 = vsel %vm2080, %v2079, %v2042
  %vm2087 = vcmask 195584
  %v2088 = vsel %vm2087, %v2081, %v2056
  %v2089 = vsel %vm2087, %v2082, %v2058
  %v2090 = vsel %vm2087, %v2083, %v2060
  %v2091 = vsel %vm2087, %v2084, %v2062
  %v2092 = vsel %vm2087, %v2085, %v2064
  %v2093 = vsel %vm2087, %v2086, %v2066
  %v2094 = vmul.f32 %v2088, 0.17677669
  %v2095 = vmul.f32 %v2089, 0.17677669
  %v2096 = vmul.f32 %v2090, 0.17677669
  %v2097 = vmul.f32 %v2091, 0.17677669
  %v2098 = vmul.f32 %v2092, 0.17677669
  %v2099 = vmul.f32 %v2093, 0.17677669
  %v2106 = vrot.slane %v2095, 7
  %vm2107 = vcmask 1041409
  %v2108 = vsel %vm2107, %v2106, %v2094
  %v2109 = vrot.slane %v2096, 6
  %vm2110 = vcmask 1042434
  %v2111 = vsel %vm2110, %v2109, %v2108
  %v2112 = vrot.slane %v2097, 5
  %vm2113 = vcmask 1043459
  %v2114 = vsel %vm2113, %v2112, %v2111
  %v2115 = vrot.slane %v2098, 4
  %vm2116 = vcmask 1044484
  %v2117 = vsel %vm2116, %v2115, %v2114
  %v2118 = vrot.slane %v2099, 3
  %vm2119 = vcmask 1045509
  %v2120 = vsel %vm2119, %v2118, %v2117
  %v2122 = vrot.slane %v2094, 1
  %v2123 = vsel %vm2107, %v2095, %v2122
  %v2124 = vrot.slane %v2096, 7
  %v2125 = vsel %vm2110, %v2124, %v2123
  %v2126 = vrot.slane %v2097, 6
  %v2127 = vsel %vm2113, %v2126, %v2125
  %v2128 = vrot.slane %v2098, 5
  %v2129 = vsel %vm2116, %v2128, %v2127
  %v2130 = vrot.slane %v2099, 4
  %v2131 = vsel %vm2119, %v2130, %v2129
  %2132 = vrot.lane.b32.xlu0 %v2131, 32
  %v2133 = vpop.permute.xlu0 %2132
  %v2135 = vrot.slane %v2094, 2
  %v2136 = vrot.slane %v2095, 1
  %v2137 = vsel %vm2107, %v2136, %v2135
  %v2138 = vsel %vm2110, %v2096, %v2137
  %v2139 = vrot.slane %v2097, 7
  %v2140 = vsel %vm2113, %v2139, %v2138
  %v2141 = vrot.slane %v2098, 6
  %v2142 = vsel %vm2116, %v2141, %v2140
  %v2143 = vrot.slane %v2099, 5
  %v2144 = vsel %vm2119, %v2143, %v2142
  %2145 = vrot.lane.b32.xlu0 %v2144, 64
  %v2146 = vpop.permute.xlu0 %2145
  %v2148 = vrot.slane %v2094, 3
  %v2149 = vrot.slane %v2095, 2
  %v2150 = vsel %vm2107, %v2149, %v2148
  %v2151 = vrot.slane %v2096, 1
  %v2152 = vsel %vm2110, %v2151, %v2150
  %v2153 = vsel %vm2113, %v2097, %v2152
  %v2154 = vrot.slane %v2098, 7
  %v2155 = vsel %vm2116, %v2154, %v2153
  %v2156 = vrot.slane %v2099, 6
  %v2157 = vsel %vm2119, %v2156, %v2155
  %2158 = vrot.lane.b32.xlu0 %v2157, 96
  %v2159 = vpop.permute.xlu0 %2158
  %v2161 = vrot.slane %v2094, 4
  %v2162 = vrot.slane %v2095, 3
  %v2163 = vsel %vm2107, %v2162, %v2161
  %v2164 = vrot.slane %v2096, 2
  %v2165 = vsel %vm2110, %v2164, %v2163
  %v2166 = vrot.slane %v2097, 1
  %v2167 = vsel %vm2113, %v2166, %v2165
  %v2168 = vsel %vm2116, %v2098, %v2167
  %v2169 = vrot.slane %v2099, 7
  %v2170 = vsel %vm2119, %v2169, %v2168
  %v2172 = vrot.slane %v2094, 5
  %v2173 = vrot.slane %v2095, 4
  %v2174 = vsel %vm2107, %v2173, %v2172
  %v2175 = vrot.slane %v2096, 3
  %v2176 = vsel %vm2110, %v2175, %v2174
  %v2177 = vrot.slane %v2097, 2
  %v2178 = vsel %vm2113, %v2177, %v2176
  %v2179 = vrot.slane %v2098, 1
  %v2180 = vsel %vm2116, %v2179, %v2178
  %v2181 = vsel %vm2119, %v2099, %v2180
  %2182 = vrot.lane.b32.xlu0 %v2181, 32
  %v2183 = vpop.permute.xlu0 %2182
  %v2185 = vrot.slane %v2094, 6
  %v2186 = vrot.slane %v2095, 5
  %v2187 = vsel %vm2107, %v2186, %v2185
  %v2188 = vrot.slane %v2096, 4
  %v2189 = vsel %vm2110, %v2188, %v2187
  %v2190 = vrot.slane %v2097, 3
  %v2191 = vsel %vm2113, %v2190, %v2189
  %v2192 = vrot.slane %v2098, 2
  %v2193 = vsel %vm2116, %v2192, %v2191
  %v2194 = vrot.slane %v2099, 1
  %v2195 = vsel %vm2119, %v2194, %v2193
  %2196 = vrot.lane.b32.xlu0 %v2195, 64
  %v2197 = vpop.permute.xlu0 %2196
  %v2199 = vrot.slane %v2094, 7
  %v2200 = vrot.slane %v2095, 6
  %v2201 = vsel %vm2107, %v2200, %v2199
  %v2202 = vrot.slane %v2096, 5
  %v2203 = vsel %vm2110, %v2202, %v2201
  %v2204 = vrot.slane %v2097, 4
  %v2205 = vsel %vm2113, %v2204, %v2203
  %v2206 = vrot.slane %v2098, 3
  %v2207 = vsel %vm2116, %v2206, %v2205
  %v2208 = vrot.slane %v2099, 2
  %v2209 = vsel %vm2119, %v2208, %v2207
  %2210 = vrot.lane.b32.xlu0 %v2209, 96
  %v2211 = vpop.permute.xlu0 %2210
  %v2213 = vsel %vm763, %v2120, %v2133
  %vm2214 = vcmask 523264
  %v2215 = vsel %vm2214, %v2213, %v2146
  %vm2216 = vcmask 785408
  %v2217 = vsel %vm2216, %v2215, %v2159
  %v2218 = vsel %vm763, %v2170, %v2183
  %v2219 = vsel %vm2214, %v2218, %v2197
  %v2220 = vsel %vm2216, %v2219, %v2211
  %2221 = vst [vmem:[%s16] sm:$0x3f] %v2217
  %2222 = vst [vmem:[%s16 + $0x8] sm:$0x3f] %v2220
  %v2223 = vsel %vm763, %v830, 0.0
  %v2224 = vrot.slane %v2223, 4
  %v2225 = vadd.f32 %v2223, %v2224
  %v2226 = vrot.slane %v2225, 2
  %v2227 = vadd.f32 %v2225, %v2226
  %v2228 = vrot.slane %v2227, 1
  %v2229 = vadd.f32 %v2227, %v2228
  %v2230 = vsel %vm763, %v831, 0.0
  %v2231 = vrot.slane %v2230, 4
  %v2232 = vadd.f32 %v2230, %v2231
  %v2233 = vrot.slane %v2232, 2
  %v2234 = vadd.f32 %v2232, %v2233
  %v2235 = vrot.slane %v2234, 1
  %v2236 = vadd.f32 %v2234, %v2235
  %v2237 = vsel %vm763, %v832, 0.0
  %v2238 = vrot.slane %v2237, 4
  %v2239 = vadd.f32 %v2237, %v2238
  %v2240 = vrot.slane %v2239, 2
  %v2241 = vadd.f32 %v2239, %v2240
  %v2242 = vrot.slane %v2241, 1
  %v2243 = vadd.f32 %v2241, %v2242
  %v2244 = vsel %vm763, %v833, 0.0
  %v2245 = vrot.slane %v2244, 4
  %v2246 = vadd.f32 %v2244, %v2245
  %v2247 = vrot.slane %v2246, 2
  %v2248 = vadd.f32 %v2246, %v2247
  %v2249 = vrot.slane %v2248, 1
  %v2250 = vadd.f32 %v2248, %v2249
  %v2251 = vsel %vm763, %v834, 0.0
  %v2252 = vrot.slane %v2251, 4
  %v2253 = vadd.f32 %v2251, %v2252
  %v2254 = vrot.slane %v2253, 2
  %v2255 = vadd.f32 %v2253, %v2254
  %v2256 = vrot.slane %v2255, 1
  %v2257 = vadd.f32 %v2255, %v2256
  %v2258 = vsel %vm763, %v835, 0.0
  %v2259 = vrot.slane %v2258, 4
  %v2260 = vadd.f32 %v2258, %v2259
  %v2261 = vrot.slane %v2260, 2
  %v2262 = vadd.f32 %v2260, %v2261
  %v2263 = vrot.slane %v2262, 1
  %v2264 = vadd.f32 %v2262, %v2263
  %v2265 = vrcp.pop 8.0
  %v2266 = vmul.f32 %v2229, %v2265
  %v2267 = vmul.f32 %v2236, %v2265
  %v2268 = vmul.f32 %v2243, %v2265
  %v2269 = vmul.f32 %v2250, %v2265
  %v2270 = vmul.f32 %v2257, %v2265
  %v2271 = vmul.f32 %v2264, %v2265
  %v2272 = vpack.c.bf16 %v2266, %v2266
  %v2273 = vpack.c.bf16 %v2267, %v2267
  %v2274 = vpack.c.bf16 %v2268, %v2268
  %v2275 = vpack.c.bf16 %v2269, %v2269
  %v2276 = vpack.c.bf16 %v2270, %v2270
  %v2277 = vpack.c.bf16 %v2271, %v2271
  %v2278 = vld [vmem:[%s14] sm:$0xf]
  %v2279 = vld [vmem:[%s14 + $0x4] sm:$0xf]
  %v2280 = vld [vmem:[%s14 + $0x8] sm:$0xf]
  %v2281 = vld [vmem:[%s14 + $0xc] sm:$0xf]
  %v2282 = vld [vmem:[%s15] sm:$0x1]
  %v2284 = vlaneseq
  %v2285 = vshrl.u32 %v2284, 7
  %v2286 = vsub.s32 0, %v2285
  %v2287 = vrot.slane %v2282, %v2286
  %v2295 = vunpack.c.l.b16 %v2272
  %v2296 = vunpack.c.l.b16 %v2273
  %v2297 = vunpack.c.l.b16 %v2274
  %v2298 = vunpack.c.l.b16 %v2275
  %v2299 = vunpack.c.l.b16 %v2276
  %v2300 = vunpack.c.l.b16 %v2277
  %v2301 = vsel %vm2107, %v2296, %v2295
  %v2302 = vsel %vm2110, %v2297, %v2301
  %v2303 = vsel %vm2113, %v2298, %v2302
  %v2304 = vsel %vm2116, %v2299, %v2303
  %v2305 = vsel %vm2119, %v2300, %v2304
  %v2306 = vpack.c.b16 %v2305, %v2305
  %v2311 = vunpack.c.l.b16 %v2278
  %v2312 = vunpack.c.l.b16 %v2279
  %v2313 = vunpack.c.l.b16 %v2280
  %v2314 = vunpack.c.l.b16 %v2281
  %v2315 = vpack.c.b16 %v2312, %v2311
  %v2316 = vpack.c.b16 %v2314, %v2313
  %v2320 = vsel %vm763, %v2306, 0
  %2322 = vmatprep.subr.bf16.mxu0 0
  %2323 = vmatpush1.bf16.msra.mxu0 %v2315
  %2324 = vmatprep.subr.bf16.mxu0 0
  %2325 = vmatpush1.bf16.msra.mxu0 %v2316
  %2326 = vmatprep.subr.bf16.mxu0 0
  %2327 = vmatpush1.bf16.msra.mxu0 0
  %2328 = vmatprep.subr.bf16.mxu0 0
  %2329 = vmatpush1.bf16.msra.mxu0 0
  %2330 = vmatprep.subr.bf16.mxu0 0
  %2331 = vmatpush1.bf16.msra.mxu0 0
  %2332 = vmatprep.subr.bf16.mxu0 0
  %2333 = vmatpush1.bf16.msra.mxu0 0
  %2334 = vmatprep.subr.bf16.mxu0 0
  %2335 = vmatpush1.bf16.msra.mxu0 0
  %2336 = vmatprep.subr.bf16.mxu0 0
  %2337 = vmatpush1.bf16.msra.mxu0 0
  %2338 = vmatprep.subr.bf16.mxu0 0
  %2339 = vmatpush1.bf16.msra.mxu0 0
  %2340 = vmatprep.subr.bf16.mxu0 0
  %2341 = vmatpush1.bf16.msra.mxu0 0
  %2342 = vmatprep.subr.bf16.mxu0 0
  %2343 = vmatpush1.bf16.msra.mxu0 0
  %2344 = vmatprep.subr.bf16.mxu0 0
  %2345 = vmatpush1.bf16.msra.mxu0 0
  %2346 = vmatprep.subr.bf16.mxu0 0
  %2347 = vmatpush1.bf16.msra.mxu0 0
  %2348 = vmatprep.subr.bf16.mxu0 0
  %2349 = vmatpush1.bf16.msra.mxu0 0
  %2350 = vmatprep.subr.bf16.mxu0 0
  %2351 = vmatpush1.bf16.msra.mxu0 0
  %2352 = vmatprep.subr.bf16.mxu0 0
  %2353 = vmatpush1.bf16.msra.mxu0 0
  %2354 = vmatprep.mubr.bf16.mxu0 0
  %2355 = vmatmul.mubr.bf16.gmra.mrb[0].mxu0 %v2320
  %v2356 = vpop.f32.mrb[0].mxu0
  %v2357 = vadd.f32 %v2287, %v2356
  %v2358 = vpop.f32.mrb[0].mxu0
  %v2359 = vpop.f32.mrb[0].mxu0
  %v2360 = vpop.f32.mrb[0].mxu0
  %2361 = vdwg.mxu0
  %vm2362 = vcmask 13312
  %2363 = vst.msk [vmem:[%s17] sm:$0x3f] %vm2362, %v2357
  // Predicated region
  $region66: #{mm_link_predictor_forward.1} parent=0 // pred_check
    _
  $region67: #{mm_link_predictor_forward.1} parent=0 // pred_check_branch
    %2365 = sbr.rel (0) target = $region69
  $region68: #{mm_link_predictor_forward.1} parent=0 // pred_region
    _
  $region69: #{mm_link_predictor_forward.1} parent=0 // pred_fallthru
    _
  // Predicated region
  $region70: #{mm_link_predictor_forward.1} parent=0 // pred_check
    _
  $region71: #{mm_link_predictor_forward.1} parent=0 // pred_check_branch
    %2367 = sbr.rel (0) target = $region73
  $region72: #{mm_link_predictor_forward.1} parent=0 // pred_region
    _
  $region73: #{mm_link_predictor_forward.1} parent=0 // pred_fallthru
    _
  // Predicated region
  $region74: #{mm_link_predictor_forward.1} parent=0 // pred_check
    _
  $region75: #{mm_link_predictor_forward.1} parent=0 // pred_check_branch
    %2369 = sbr.rel (0) target = $region77
  $region76: #{mm_link_predictor_forward.1} parent=0 // pred_region
    _
  $region77: #{mm_link_predictor_forward.1} parent=0 // pred_fallthru
    _
  // Predicated region
  $region78: #{mm_link_predictor_forward.1} parent=0 // pred_check
    _
  $region79: #{mm_link_predictor_forward.1} parent=0 // pred_check_branch
    %2371 = sbr.rel (0) target = $region81
  $region80: #{mm_link_predictor_forward.1} parent=0 // pred_region
    _
  $region81: #{mm_link_predictor_forward.1} parent=0 // pred_fallthru
    _

</llo_original>
